<compile_context>
chip_gen: v7x
topology: tpu7x:2x2x1
jax: 0.10.0
libtpu: 0.0.40
codegen_flags: <defaults>
</compile_context>

<pallas_src>
import functools

import jax
import jax.numpy as jnp
from jax.experimental import pallas as pl
from jax.experimental.pallas import tpu as pltpu

GROUPS = 16
EPS = 1e-5  # torch.nn.GroupNorm default


# ----------------------------- kernel helpers ------------------------------

def _silu(v):
    return v * jax.nn.sigmoid(v)


def _group_norm(x, spread_ref, gamma, beta):
    # x: (C, HW) channels-on-sublanes / pixels-on-lanes.
    # spread_ref: (C, C) same-group indicator, pre-scaled by 1/(HW * ch_per_group).
    # gamma / beta: (C, 1).
    s = jnp.sum(x, axis=1, keepdims=True)                         # (C, 1) lane reduce
    ss = jnp.sum(x * x, axis=1, keepdims=True)                    # (C, 1)
    stats = jnp.concatenate([s, ss], axis=1)                      # (C, 2)
    g = jnp.dot(spread_ref[...], stats,
                preferred_element_type=jnp.float32)               # (C, 2): mean | E[x^2]
    mean = g[:, 0:1]
    var = g[:, 1:2] - mean * mean                                 # biased var (torch GN)
    inv = jax.lax.rsqrt(var + EPS)
    scale = inv * gamma                                           # (C, 1)
    shift = beta - mean * scale
    return x * scale + shift                                      # lane-broadcast VPU


def _im2col_rows(h, masks_ref, W, HW):
    # h: (C, HW).  Returns (9*C, HW): the 9 conv taps stacked along the
    # sublane/K axis.  Pixel shifts are lane rotations; border wraparound is
    # removed with precomputed per-tap lane masks keyed on the OUTPUT pixel.
    taps = []
    t = 0
    for dy in (-1, 0, 1):
        for dx in (-1, 0, 1):
            off = dy * W + dx
            if off == 0:
                tap = h                                           # center tap, no mask
            else:
                tap = pltpu.roll(h, shift=(-off) % HW, axis=1)    # tap[p] = h[p + off]
                tap = tap * masks_ref[t:t + 1, :]                 # kill border wrap
            taps.append(tap)
            t += 1
    return jnp.concatenate(taps, axis=0)                          # (9*C, HW)


# -------------------------------- kernel -----------------------------------

def _resnet_block_kernel(x_ref, bias1_ref, masks_ref,
                         cin_ref, cout_ref, sprin_ref, sprout_ref,
                         w1_ref, w2_ref, scw_ref,
                         o_ref, *, W, HW):
    x = x_ref[...]                                                # (Cin, HW)

    g1, b1 = cin_ref[:, 0:1], cin_ref[:, 1:2]
    g2, b2 = cout_ref[:, 0:1], cout_ref[:, 1:2]
    bias_out = cout_ref[:, 2:3]                                   # cb2 + shortcut bias

    # ---- norm1 -> SiLU -> conv1: one (Cout, 9Cin) @ (9Cin, HW) MXU matmul ----
    h = _silu(_group_norm(x, sprin_ref, g1, b1))
    col = _im2col_rows(h, masks_ref, W, HW)
    h = jnp.dot(w1_ref[...], col, preferred_element_type=jnp.float32)
    h = h + bias1_ref[...]                                        # conv1 bias + emb proj

    # ---- norm2 -> SiLU -> conv2: one (Cout, 9Cout) @ (9Cout, HW) matmul ----
    h = _silu(_group_norm(h, sprout_ref, g2, b2))
    col = _im2col_rows(h, masks_ref, W, HW)
    h = jnp.dot(w2_ref[...], col, preferred_element_type=jnp.float32)

    # ---- 1x1 shortcut (biases folded into bias_out), lane-dense store ----
    sc = jnp.dot(scw_ref[...], x, preferred_element_type=jnp.float32)
    o_ref[...] = h + sc + bias_out


# ------------------------------- wrapper ------------------------------------

def prepare_resnet_block_params(p, H, W):
    """One-time preprocessing of the parameter set (hoisted out of the hot path)."""
    Cout, Cin = p["w1"].shape[0], p["w1"].shape[1]
    HW = H * W
    f32 = jnp.float32

    def col(v):
        return jnp.asarray(v, f32).reshape(-1, 1)

    def pack_taps(w):  # OIHW (Cout, C, 3, 3) -> (Cout, 9*C), tap-major along K
        return jnp.concatenate(
            [w[:, :, ky, kx].astype(f32) for ky in range(3) for kx in range(3)],
            axis=1)

    def spread(C):     # same-group indicator with 1/n folded in
        cg = C // GROUPS
        same = (jnp.arange(C)[:, None] // cg) == (jnp.arange(C)[None, :] // cg)
        return same.astype(f32) / float(HW * cg)

    if p.get("scw", None) is not None:
        scw = p["scw"][:, :, 0, 0].astype(f32)                    # (Cout, Cin)
        sc_bias = col(p["scb"])
    else:  # identity shortcut
        assert Cin == Cout, "identity shortcut requires in_channels == out_channels"
        scw = jnp.eye(Cout, Cin, dtype=f32)
        sc_bias = jnp.zeros((Cout, 1), f32)

    # per-tap validity masks on the output pixel index (lane axis)
    pix = jnp.arange(HW, dtype=jnp.int32)
    ys, xs = pix // W, pix % W
    rows = []
    for dy in (-1, 0, 1):
        for dx in (-1, 0, 1):
            ok = jnp.ones((HW,), bool)
            if dy == -1:
                ok = ok & (ys > 0)
            elif dy == 1:
                ok = ok & (ys < H - 1)
            if dx == -1:
                ok = ok & (xs > 0)
            elif dx == 1:
                ok = ok & (xs < W - 1)
            rows.append(ok)
    masks = jnp.stack(rows, axis=0).astype(f32)                   # (9, HW)

    return dict(
        masks=masks,
        cin_params=jnp.concatenate([col(p["g1"]), col(p["b1"])], axis=1),
        cout_params=jnp.concatenate(
            [col(p["g2"]), col(p["b2"]), col(p["cb2"]) + sc_bias], axis=1),
        spread_in=spread(Cin), spread_out=spread(Cout),
        w1=pack_taps(p["w1"]), w2=pack_taps(p["w2"]), scw=scw,
        pw=jnp.asarray(p["pw"], f32),                             # (ED, Cout)
        bias1_base=jnp.asarray(p["cb1"], f32) + jnp.asarray(p["pb"], f32),
    )


@jax.jit
def resnet_block_forward(x_nchw, emb, packed):
    B, Cin, H, W = x_nchw.shape
    Cout = packed["w1"].shape[0]
    HW = H * W

    # Layout plumbing is a free reshape: NCHW -> (B, Cin, H*W); inside the
    # kernel channels live on sublanes and pixels on lanes.
    x_flat = x_nchw.reshape(B, Cin, HW).astype(jnp.float32)

    # Timestep-embedding projection for the whole batch as one XLA matmul,
    # folded with the conv1 bias into a per-image (Cout, 1) column.
    bias1 = (emb.astype(jnp.float32) @ packed["pw"]
             + packed["bias1_base"]).reshape(B, Cout, 1)

    const_names = ["masks", "cin_params", "cout_params", "spread_in",
                   "spread_out", "w1", "w2", "scw"]
    const_inputs = [packed[k] for k in const_names]

    def const_spec(a):
        nd = a.ndim
        return pl.BlockSpec(a.shape, lambda b, _nd=nd: (0,) * _nd)

    in_specs = ([pl.BlockSpec((None, Cin, HW), lambda b: (b, 0, 0)),
                 pl.BlockSpec((None, Cout, 1), lambda b: (b, 0, 0))]
                + [const_spec(a) for a in const_inputs])

    kernel = functools.partial(_resnet_block_kernel, W=W, HW=HW)

    out = pl.pallas_call(
        kernel,
        out_shape=jax.ShapeDtypeStruct((B, Cout, HW), jnp.float32),
        grid=(B,),
        in_specs=in_specs,
        out_specs=pl.BlockSpec((None, Cout, HW), lambda b: (b, 0, 0)),
        compiler_params=pltpu.CompilerParams(
            dimension_semantics=("parallel",)),                   # v7x megacore batch split
    )(x_flat, bias1, *const_inputs)

    return out.reshape(B, Cout, H, W)                             # (B,Cout,HW) -> NCHW


# --------------------------- pure-JAX reference ------------------------------

def ref_forward(x, emb, p):
    def gn(v, gamma, beta):
        B, C, H, W = v.shape
        vg = v.reshape(B, GROUPS, C // GROUPS, H, W)
        mean = vg.mean(axis=(2, 3, 4), keepdims=True)
        var = vg.var(axis=(2, 3, 4), keepdims=True)
        vn = ((vg - mean) / jnp.sqrt(var + EPS)).reshape(B, C, H, W)
        return vn * gamma.reshape(1, C, 1, 1) + beta.reshape(1, C, 1, 1)

    def conv(v, w, b, pad):
        y = jax.lax.conv_general_dilated(
            v, w, (1, 1), ((pad, pad), (pad, pad)),
            dimension_numbers=("NCHW", "OIHW", "NCHW"))
        return y + b.reshape(1, -1, 1, 1)

    silu = lambda v: v * jax.nn.sigmoid(v)
    h = conv(silu(gn(x, p["g1"], p["b1"])), p["w1"], p["cb1"], 1)
    h = h + (emb @ p["pw"] + p["pb"])[:, :, None, None]
    h = conv(silu(gn(h, p["g2"], p["b2"])), p["w2"], p["cb2"], 1)
    return h + conv(x, p["scw"], p["scb"], 0)


# ---------------------------------- main -------------------------------------

if __name__ == "__main__":
    B, Cin, Cout, ED, H, W = 2, 16, 32, 32, 16, 16

    keys = jax.random.split(jax.random.PRNGKey(0), 14)
    params = dict(
        g1=1.0 + 0.1 * jax.random.normal(keys[0], (Cin,), jnp.float32),
        b1=0.1 * jax.random.normal(keys[1], (Cin,), jnp.float32),
        w1=0.1 * jax.random.normal(keys[2], (Cout, Cin, 3, 3), jnp.float32),
        cb1=0.1 * jax.random.normal(keys[3], (Cout,), jnp.float32),
        pw=0.1 * jax.random.normal(keys[4], (ED, Cout), jnp.float32),
        pb=0.1 * jax.random.normal(keys[5], (Cout,), jnp.float32),
        g2=1.0 + 0.1 * jax.random.normal(keys[6], (Cout,), jnp.float32),
        b2=0.1 * jax.random.normal(keys[7], (Cout,), jnp.float32),
        w2=0.1 * jax.random.normal(keys[8], (Cout, Cout, 3, 3), jnp.float32),
        cb2=0.1 * jax.random.normal(keys[9], (Cout,), jnp.float32),
        scw=0.1 * jax.random.normal(keys[10], (Cout, Cin, 1, 1), jnp.float32),
        scb=0.1 * jax.random.normal(keys[11], (Cout,), jnp.float32),
    )
    x = jax.random.normal(keys[12], (B, Cin, H, W), jnp.float32)
    emb = jax.random.normal(keys[13], (B, ED), jnp.float32)

    packed = prepare_resnet_block_params(params, H, W)   # hoisted, once per param set
    out = jax.block_until_ready(resnet_block_forward(x, emb, packed))
    assert out.shape == (B, Cout, H, W), out.shape

    ref = ref_forward(x, emb, params)
    max_err = float(jnp.max(jnp.abs(out - ref)))
    if not bool(jnp.allclose(out, ref, atol=1e-3, rtol=1e-3)):
        raise SystemExit(f"mismatch vs reference, max abs err = {max_err:e}")

    print("KERNEL_OK")
</pallas_src>

<mosaic_0001>
module attributes {stable_mosaic.version = 11 : i64} {
  func.func @_resnet_block_kernel(%arg0: i32, %arg1: memref<1x16x256xf32, #tpu.memory_space<vmem>>, %arg2: memref<1x32x1xf32, #tpu.memory_space<vmem>>, %arg3: memref<9x256xf32, #tpu.memory_space<vmem>>, %arg4: memref<16x2xf32, #tpu.memory_space<vmem>>, %arg5: memref<32x3xf32, #tpu.memory_space<vmem>>, %arg6: memref<16x16xf32, #tpu.memory_space<vmem>>, %arg7: memref<32x32xf32, #tpu.memory_space<vmem>>, %arg8: memref<32x144xf32, #tpu.memory_space<vmem>>, %arg9: memref<32x288xf32, #tpu.memory_space<vmem>>, %arg10: memref<32x16xf32, #tpu.memory_space<vmem>>, %arg11: memref<1x32x256xf32, #tpu.memory_space<vmem>>) attributes {dimension_semantics = [#tpu.dimension_semantics<parallel>], iteration_bounds = array<i64: 2>, scalar_prefetch = 0 : i64, scratch_operands = 0 : i64, tpu.core_type = #tpu.core_type<tc>, window_params = [{transform_indices = @transform_0, window_bounds = array<i64: 1, 16, 256>}, {transform_indices = @transform_1, window_bounds = array<i64: 1, 32, 1>}, {pipeline_mode = #tpu.pipeline_mode<synchronous>, transform_indices = @transform_2, window_bounds = array<i64: 9, 256>}, {pipeline_mode = #tpu.pipeline_mode<synchronous>, transform_indices = @transform_3, window_bounds = array<i64: 16, 2>}, {pipeline_mode = #tpu.pipeline_mode<synchronous>, transform_indices = @transform_4, window_bounds = array<i64: 32, 3>}, {pipeline_mode = #tpu.pipeline_mode<synchronous>, transform_indices = @transform_5, window_bounds = array<i64: 16, 16>}, {pipeline_mode = #tpu.pipeline_mode<synchronous>, transform_indices = @transform_6, window_bounds = array<i64: 32, 32>}, {pipeline_mode = #tpu.pipeline_mode<synchronous>, transform_indices = @transform_7, window_bounds = array<i64: 32, 144>}, {pipeline_mode = #tpu.pipeline_mode<synchronous>, transform_indices = @transform_8, window_bounds = array<i64: 32, 288>}, {pipeline_mode = #tpu.pipeline_mode<synchronous>, transform_indices = @transform_9, window_bounds = array<i64: 32, 16>}, {transform_indices = @transform_10, window_bounds = array<i64: 1, 32, 256>}]} {
    %c0 = arith.constant 0 : index
    %c0_0 = arith.constant 0 : index
    %c0_1 = arith.constant 0 : index
    %0 = vector.load %arg1[%c0, %c0_0, %c0_1] : memref<1x16x256xf32, #tpu.memory_space<vmem>>, vector<1x16x256xf32>
    %1 = vector.shape_cast %0 : vector<1x16x256xf32> to vector<16x256xf32>
    %c0_2 = arith.constant 0 : index
    %c0_3 = arith.constant 0 : index
    %2 = vector.load %arg4[%c0_2, %c0_3] : memref<16x2xf32, #tpu.memory_space<vmem>>, vector<16x1xf32>
    %c0_4 = arith.constant 0 : index
    %c1 = arith.constant 1 : index
    %3 = vector.load %arg4[%c0_4, %c1] : memref<16x2xf32, #tpu.memory_space<vmem>>, vector<16x1xf32>
    %c0_5 = arith.constant 0 : index
    %c0_6 = arith.constant 0 : index
    %4 = vector.load %arg5[%c0_5, %c0_6] : memref<32x3xf32, #tpu.memory_space<vmem>>, vector<32x1xf32>
    %c0_7 = arith.constant 0 : index
    %c1_8 = arith.constant 1 : index
    %5 = vector.load %arg5[%c0_7, %c1_8] : memref<32x3xf32, #tpu.memory_space<vmem>>, vector<32x1xf32>
    %c0_9 = arith.constant 0 : index
    %c2 = arith.constant 2 : index
    %6 = vector.load %arg5[%c0_9, %c2] : memref<32x3xf32, #tpu.memory_space<vmem>>, vector<32x1xf32>
    %cst = arith.constant dense<0.000000e+00> : vector<16xf32>
    %7 = vector.multi_reduction <add>, %1, %cst [1] : vector<16x256xf32> to vector<16xf32>
    %8 = vector.shape_cast %7 : vector<16xf32> to vector<16x1xf32>
    %9 = arith.mulf %1, %1 : vector<16x256xf32>
    %cst_10 = arith.constant dense<0.000000e+00> : vector<16xf32>
    %10 = vector.multi_reduction <add>, %9, %cst_10 [1] : vector<16x256xf32> to vector<16xf32>
    %11 = vector.shape_cast %10 : vector<16xf32> to vector<16x1xf32>
    %12 = tpu.concatenate %8, %11 in 1 : vector<16x1xf32>, vector<16x1xf32> -> vector<16x2xf32>
    %c0_11 = arith.constant 0 : index
    %c0_12 = arith.constant 0 : index
    %13 = vector.load %arg6[%c0_11, %c0_12] : memref<16x16xf32, #tpu.memory_space<vmem>>, vector<16x16xf32>
    %cst_13 = arith.constant dense<0.000000e+00> : vector<16x2xf32>
    %14 = tpu.matmul %13, %12, %cst_13 {dimension_numbers = #tpu.dot_dimension_numbers<[1], [0], [0], [1], [0, 0, 1, 1], [], []>} : vector<16x16xf32>, vector<16x2xf32>, vector<16x2xf32> -> vector<16x2xf32>
    %15 = vector.extract_strided_slice %14 {offsets = [0, 0], sizes = [16, 1], strides = [1, 1]} : vector<16x2xf32> to vector<16x1xf32>
    %16 = vector.extract_strided_slice %14 {offsets = [0, 1], sizes = [16, 1], strides = [1, 1]} : vector<16x2xf32> to vector<16x1xf32>
    %17 = arith.mulf %15, %15 : vector<16x1xf32>
    %18 = arith.subf %16, %17 : vector<16x1xf32>
    %cst_14 = arith.constant 9.99999974E-6 : f32
    %19 = vector.broadcast %cst_14 : f32 to vector<16x1xf32>
    %20 = arith.addf %18, %19 : vector<16x1xf32>
    %21 = math.rsqrt %20 : vector<16x1xf32>
    %22 = arith.mulf %21, %2 : vector<16x1xf32>
    %23 = arith.mulf %15, %22 : vector<16x1xf32>
    %24 = arith.subf %3, %23 : vector<16x1xf32>
    %25 = vector.broadcast %22 : vector<16x1xf32> to vector<16x256xf32>
    %26 = arith.mulf %1, %25 : vector<16x256xf32>
    %27 = vector.broadcast %24 : vector<16x1xf32> to vector<16x256xf32>
    %28 = arith.addf %26, %27 : vector<16x256xf32>
    %29 = arith.negf %28 : vector<16x256xf32>
    %30 = math.exp %29 : vector<16x256xf32>
    %cst_15 = arith.constant 1.000000e+00 : f32
    %31 = vector.broadcast %cst_15 : f32 to vector<16x256xf32>
    %32 = arith.addf %31, %30 : vector<16x256xf32>
    %33 = arith.divf %31, %32 : vector<16x256xf32>
    %34 = arith.mulf %28, %33 : vector<16x256xf32>
    %c17_i32 = arith.constant 17 : i32
    %35 = tpu.dynamic_rotate %34 by %c17_i32 dim 1 : vector<16x256xf32>, i32 -> vector<16x256xf32>
    %c0_16 = arith.constant 0 : index
    %c0_17 = arith.constant 0 : index
    %36 = vector.load %arg3[%c0_16, %c0_17] : memref<9x256xf32, #tpu.memory_space<vmem>>, vector<1x256xf32>
    %37 = vector.broadcast %36 : vector<1x256xf32> to vector<16x256xf32>
    %38 = arith.mulf %35, %37 : vector<16x256xf32>
    %c16_i32 = arith.constant 16 : i32
    %39 = tpu.dynamic_rotate %34 by %c16_i32 dim 1 : vector<16x256xf32>, i32 -> vector<16x256xf32>
    %c1_18 = arith.constant 1 : index
    %c0_19 = arith.constant 0 : index
    %40 = vector.load %arg3[%c1_18, %c0_19] : memref<9x256xf32, #tpu.memory_space<vmem>>, vector<1x256xf32>
    %41 = vector.broadcast %40 : vector<1x256xf32> to vector<16x256xf32>
    %42 = arith.mulf %39, %41 : vector<16x256xf32>
    %c15_i32 = arith.constant 15 : i32
    %43 = tpu.dynamic_rotate %34 by %c15_i32 dim 1 : vector<16x256xf32>, i32 -> vector<16x256xf32>
    %c2_20 = arith.constant 2 : index
    %c0_21 = arith.constant 0 : index
    %44 = vector.load %arg3[%c2_20, %c0_21] : memref<9x256xf32, #tpu.memory_space<vmem>>, vector<1x256xf32>
    %45 = vector.broadcast %44 : vector<1x256xf32> to vector<16x256xf32>
    %46 = arith.mulf %43, %45 : vector<16x256xf32>
    %c1_i32 = arith.constant 1 : i32
    %47 = tpu.dynamic_rotate %34 by %c1_i32 dim 1 : vector<16x256xf32>, i32 -> vector<16x256xf32>
    %c3 = arith.constant 3 : index
    %c0_22 = arith.constant 0 : index
    %48 = vector.load %arg3[%c3, %c0_22] : memref<9x256xf32, #tpu.memory_space<vmem>>, vector<1x256xf32>
    %49 = vector.broadcast %48 : vector<1x256xf32> to vector<16x256xf32>
    %50 = arith.mulf %47, %49 : vector<16x256xf32>
    %c255_i32 = arith.constant 255 : i32
    %51 = tpu.dynamic_rotate %34 by %c255_i32 dim 1 : vector<16x256xf32>, i32 -> vector<16x256xf32>
    %c5 = arith.constant 5 : index
    %c0_23 = arith.constant 0 : index
    %52 = vector.load %arg3[%c5, %c0_23] : memref<9x256xf32, #tpu.memory_space<vmem>>, vector<1x256xf32>
    %53 = vector.broadcast %52 : vector<1x256xf32> to vector<16x256xf32>
    %54 = arith.mulf %51, %53 : vector<16x256xf32>
    %c241_i32 = arith.constant 241 : i32
    %55 = tpu.dynamic_rotate %34 by %c241_i32 dim 1 : vector<16x256xf32>, i32 -> vector<16x256xf32>
    %c6 = arith.constant 6 : index
    %c0_24 = arith.constant 0 : index
    %56 = vector.load %arg3[%c6, %c0_24] : memref<9x256xf32, #tpu.memory_space<vmem>>, vector<1x256xf32>
    %57 = vector.broadcast %56 : vector<1x256xf32> to vector<16x256xf32>
    %58 = arith.mulf %55, %57 : vector<16x256xf32>
    %c240_i32 = arith.constant 240 : i32
    %59 = tpu.dynamic_rotate %34 by %c240_i32 dim 1 : vector<16x256xf32>, i32 -> vector<16x256xf32>
    %c7 = arith.constant 7 : index
    %c0_25 = arith.constant 0 : index
    %60 = vector.load %arg3[%c7, %c0_25] : memref<9x256xf32, #tpu.memory_space<vmem>>, vector<1x256xf32>
    %61 = vector.broadcast %60 : vector<1x256xf32> to vector<16x256xf32>
    %62 = arith.mulf %59, %61 : vector<16x256xf32>
    %c239_i32 = arith.constant 239 : i32
    %63 = tpu.dynamic_rotate %34 by %c239_i32 dim 1 : vector<16x256xf32>, i32 -> vector<16x256xf32>
    %c8 = arith.constant 8 : index
    %c0_26 = arith.constant 0 : index
    %64 = vector.load %arg3[%c8, %c0_26] : memref<9x256xf32, #tpu.memory_space<vmem>>, vector<1x256xf32>
    %65 = vector.broadcast %64 : vector<1x256xf32> to vector<16x256xf32>
    %66 = arith.mulf %63, %65 : vector<16x256xf32>
    %67 = tpu.concatenate %38, %42, %46, %50, %34, %54, %58, %62, %66 in 0 : vector<16x256xf32>, vector<16x256xf32>, vector<16x256xf32>, vector<16x256xf32>, vector<16x256xf32>, vector<16x256xf32>, vector<16x256xf32>, vector<16x256xf32>, vector<16x256xf32> -> vector<144x256xf32>
    %c0_27 = arith.constant 0 : index
    %c0_28 = arith.constant 0 : index
    %68 = vector.load %arg8[%c0_27, %c0_28] : memref<32x144xf32, #tpu.memory_space<vmem>>, vector<32x144xf32>
    %cst_29 = arith.constant dense<0.000000e+00> : vector<32x256xf32>
    %69 = tpu.matmul %68, %67, %cst_29 {dimension_numbers = #tpu.dot_dimension_numbers<[1], [0], [0], [1], [0, 0, 1, 1], [], []>} : vector<32x144xf32>, vector<144x256xf32>, vector<32x256xf32> -> vector<32x256xf32>
    %c0_30 = arith.constant 0 : index
    %c0_31 = arith.constant 0 : index
    %c0_32 = arith.constant 0 : index
    %70 = vector.load %arg2[%c0_30, %c0_31, %c0_32] : memref<1x32x1xf32, #tpu.memory_space<vmem>>, vector<1x32x1xf32>
    %71 = vector.shape_cast %70 : vector<1x32x1xf32> to vector<32x1xf32>
    %72 = vector.broadcast %71 : vector<32x1xf32> to vector<32x256xf32>
    %73 = arith.addf %69, %72 : vector<32x256xf32>
    %cst_33 = arith.constant dense<0.000000e+00> : vector<32xf32>
    %74 = vector.multi_reduction <add>, %73, %cst_33 [1] : vector<32x256xf32> to vector<32xf32>
    %75 = vector.shape_cast %74 : vector<32xf32> to vector<32x1xf32>
    %76 = arith.mulf %73, %73 : vector<32x256xf32>
    %cst_34 = arith.constant dense<0.000000e+00> : vector<32xf32>
    %77 = vector.multi_reduction <add>, %76, %cst_34 [1] : vector<32x256xf32> to vector<32xf32>
    %78 = vector.shape_cast %77 : vector<32xf32> to vector<32x1xf32>
    %79 = tpu.concatenate %75, %78 in 1 : vector<32x1xf32>, vector<32x1xf32> -> vector<32x2xf32>
    %c0_35 = arith.constant 0 : index
    %c0_36 = arith.constant 0 : index
    %80 = vector.load %arg7[%c0_35, %c0_36] : memref<32x32xf32, #tpu.memory_space<vmem>>, vector<32x32xf32>
    %cst_37 = arith.constant dense<0.000000e+00> : vector<32x2xf32>
    %81 = tpu.matmul %80, %79, %cst_37 {dimension_numbers = #tpu.dot_dimension_numbers<[1], [0], [0], [1], [0, 0, 1, 1], [], []>} : vector<32x32xf32>, vector<32x2xf32>, vector<32x2xf32> -> vector<32x2xf32>
    %82 = vector.extract_strided_slice %81 {offsets = [0, 0], sizes = [32, 1], strides = [1, 1]} : vector<32x2xf32> to vector<32x1xf32>
    %83 = vector.extract_strided_slice %81 {offsets = [0, 1], sizes = [32, 1], strides = [1, 1]} : vector<32x2xf32> to vector<32x1xf32>
    %84 = arith.mulf %82, %82 : vector<32x1xf32>
    %85 = arith.subf %83, %84 : vector<32x1xf32>
    %cst_38 = arith.constant 9.99999974E-6 : f32
    %86 = vector.broadcast %cst_38 : f32 to vector<32x1xf32>
    %87 = arith.addf %85, %86 : vector<32x1xf32>
    %88 = math.rsqrt %87 : vector<32x1xf32>
    %89 = arith.mulf %88, %4 : vector<32x1xf32>
    %90 = arith.mulf %82, %89 : vector<32x1xf32>
    %91 = arith.subf %5, %90 : vector<32x1xf32>
    %92 = vector.broadcast %89 : vector<32x1xf32> to vector<32x256xf32>
    %93 = arith.mulf %73, %92 : vector<32x256xf32>
    %94 = vector.broadcast %91 : vector<32x1xf32> to vector<32x256xf32>
    %95 = arith.addf %93, %94 : vector<32x256xf32>
    %96 = arith.negf %95 : vector<32x256xf32>
    %97 = math.exp %96 : vector<32x256xf32>
    %cst_39 = arith.constant 1.000000e+00 : f32
    %98 = vector.broadcast %cst_39 : f32 to vector<32x256xf32>
    %99 = arith.addf %98, %97 : vector<32x256xf32>
    %100 = arith.divf %98, %99 : vector<32x256xf32>
    %101 = arith.mulf %95, %100 : vector<32x256xf32>
    %c17_i32_40 = arith.constant 17 : i32
    %102 = tpu.dynamic_rotate %101 by %c17_i32_40 dim 1 : vector<32x256xf32>, i32 -> vector<32x256xf32>
    %c0_41 = arith.constant 0 : index
    %c0_42 = arith.constant 0 : index
    %103 = vector.load %arg3[%c0_41, %c0_42] : memref<9x256xf32, #tpu.memory_space<vmem>>, vector<1x256xf32>
    %104 = vector.broadcast %103 : vector<1x256xf32> to vector<32x256xf32>
    %105 = arith.mulf %102, %104 : vector<32x256xf32>
    %c16_i32_43 = arith.constant 16 : i32
    %106 = tpu.dynamic_rotate %101 by %c16_i32_43 dim 1 : vector<32x256xf32>, i32 -> vector<32x256xf32>
    %c1_44 = arith.constant 1 : index
    %c0_45 = arith.constant 0 : index
    %107 = vector.load %arg3[%c1_44, %c0_45] : memref<9x256xf32, #tpu.memory_space<vmem>>, vector<1x256xf32>
    %108 = vector.broadcast %107 : vector<1x256xf32> to vector<32x256xf32>
    %109 = arith.mulf %106, %108 : vector<32x256xf32>
    %c15_i32_46 = arith.constant 15 : i32
    %110 = tpu.dynamic_rotate %101 by %c15_i32_46 dim 1 : vector<32x256xf32>, i32 -> vector<32x256xf32>
    %c2_47 = arith.constant 2 : index
    %c0_48 = arith.constant 0 : index
    %111 = vector.load %arg3[%c2_47, %c0_48] : memref<9x256xf32, #tpu.memory_space<vmem>>, vector<1x256xf32>
    %112 = vector.broadcast %111 : vector<1x256xf32> to vector<32x256xf32>
    %113 = arith.mulf %110, %112 : vector<32x256xf32>
    %c1_i32_49 = arith.constant 1 : i32
    %114 = tpu.dynamic_rotate %101 by %c1_i32_49 dim 1 : vector<32x256xf32>, i32 -> vector<32x256xf32>
    %c3_50 = arith.constant 3 : index
    %c0_51 = arith.constant 0 : index
    %115 = vector.load %arg3[%c3_50, %c0_51] : memref<9x256xf32, #tpu.memory_space<vmem>>, vector<1x256xf32>
    %116 = vector.broadcast %115 : vector<1x256xf32> to vector<32x256xf32>
    %117 = arith.mulf %114, %116 : vector<32x256xf32>
    %c255_i32_52 = arith.constant 255 : i32
    %118 = tpu.dynamic_rotate %101 by %c255_i32_52 dim 1 : vector<32x256xf32>, i32 -> vector<32x256xf32>
    %c5_53 = arith.constant 5 : index
    %c0_54 = arith.constant 0 : index
    %119 = vector.load %arg3[%c5_53, %c0_54] : memref<9x256xf32, #tpu.memory_space<vmem>>, vector<1x256xf32>
    %120 = vector.broadcast %119 : vector<1x256xf32> to vector<32x256xf32>
    %121 = arith.mulf %118, %120 : vector<32x256xf32>
    %c241_i32_55 = arith.constant 241 : i32
    %122 = tpu.dynamic_rotate %101 by %c241_i32_55 dim 1 : vector<32x256xf32>, i32 -> vector<32x256xf32>
    %c6_56 = arith.constant 6 : index
    %c0_57 = arith.constant 0 : index
    %123 = vector.load %arg3[%c6_56, %c0_57] : memref<9x256xf32, #tpu.memory_space<vmem>>, vector<1x256xf32>
    %124 = vector.broadcast %123 : vector<1x256xf32> to vector<32x256xf32>
    %125 = arith.mulf %122, %124 : vector<32x256xf32>
    %c240_i32_58 = arith.constant 240 : i32
    %126 = tpu.dynamic_rotate %101 by %c240_i32_58 dim 1 : vector<32x256xf32>, i32 -> vector<32x256xf32>
    %c7_59 = arith.constant 7 : index
    %c0_60 = arith.constant 0 : index
    %127 = vector.load %arg3[%c7_59, %c0_60] : memref<9x256xf32, #tpu.memory_space<vmem>>, vector<1x256xf32>
    %128 = vector.broadcast %127 : vector<1x256xf32> to vector<32x256xf32>
    %129 = arith.mulf %126, %128 : vector<32x256xf32>
    %c239_i32_61 = arith.constant 239 : i32
    %130 = tpu.dynamic_rotate %101 by %c239_i32_61 dim 1 : vector<32x256xf32>, i32 -> vector<32x256xf32>
    %c8_62 = arith.constant 8 : index
    %c0_63 = arith.constant 0 : index
    %131 = vector.load %arg3[%c8_62, %c0_63] : memref<9x256xf32, #tpu.memory_space<vmem>>, vector<1x256xf32>
    %132 = vector.broadcast %131 : vector<1x256xf32> to vector<32x256xf32>
    %133 = arith.mulf %130, %132 : vector<32x256xf32>
    %134 = tpu.concatenate %105, %109, %113, %117, %101, %121, %125, %129, %133 in 0 : vector<32x256xf32>, vector<32x256xf32>, vector<32x256xf32>, vector<32x256xf32>, vector<32x256xf32>, vector<32x256xf32>, vector<32x256xf32>, vector<32x256xf32>, vector<32x256xf32> -> vector<288x256xf32>
    %c0_64 = arith.constant 0 : index
    %c0_65 = arith.constant 0 : index
    %135 = vector.load %arg9[%c0_64, %c0_65] : memref<32x288xf32, #tpu.memory_space<vmem>>, vector<32x288xf32>
    %cst_66 = arith.constant dense<0.000000e+00> : vector<32x256xf32>
    %136 = tpu.matmul %135, %134, %cst_66 {dimension_numbers = #tpu.dot_dimension_numbers<[1], [0], [0], [1], [0, 0, 1, 1], [], []>} : vector<32x288xf32>, vector<288x256xf32>, vector<32x256xf32> -> vector<32x256xf32>
    %c0_67 = arith.constant 0 : index
    %c0_68 = arith.constant 0 : index
    %137 = vector.load %arg10[%c0_67, %c0_68] : memref<32x16xf32, #tpu.memory_space<vmem>>, vector<32x16xf32>
    %cst_69 = arith.constant dense<0.000000e+00> : vector<32x256xf32>
    %138 = tpu.matmul %137, %1, %cst_69 {dimension_numbers = #tpu.dot_dimension_numbers<[1], [0], [0], [1], [0, 0, 1, 1], [], []>} : vector<32x16xf32>, vector<16x256xf32>, vector<32x256xf32> -> vector<32x256xf32>
    %139 = arith.addf %136, %138 : vector<32x256xf32>
    %140 = vector.broadcast %6 : vector<32x1xf32> to vector<32x256xf32>
    %141 = arith.addf %139, %140 : vector<32x256xf32>
    %c0_70 = arith.constant 0 : index
    %c0_71 = arith.constant 0 : index
    %c0_72 = arith.constant 0 : index
    %142 = vector.load %arg11[%c0_70, %c0_71, %c0_72] : memref<1x32x256xf32, #tpu.memory_space<vmem>>, vector<1x32x256xf32>
    %143 = vector.shape_cast %142 : vector<1x32x256xf32> to vector<32x256xf32>
    %144 = vector.shape_cast %141 : vector<32x256xf32> to vector<1x32x256xf32>
    tpu.vector_store %arg11[%c0_70, %c0_71, %c0_72], %144 {strides = array<i32>} : memref<1x32x256xf32, #tpu.memory_space<vmem>>, vector<1x32x256xf32>,
    return
  }
  func.func @transform_0(%arg0: i32) -> (i32, i32, i32) {
    %c0_i32 = arith.constant 0 : i32
    %c0_i32_0 = arith.constant 0 : i32
    %c0_i32_1 = arith.constant 0 : i32
    return %arg0, %c0_i32, %c0_i32_0 : i32, i32, i32
  }
  func.func @transform_1(%arg0: i32) -> (i32, i32, i32) {
    %c0_i32 = arith.constant 0 : i32
    %c0_i32_0 = arith.constant 0 : i32
    %c0_i32_1 = arith.constant 0 : i32
    return %arg0, %c0_i32, %c0_i32_0 : i32, i32, i32
  }
  func.func @transform_2(%arg0: i32) -> (i32, i32) {
    %c0_i32 = arith.constant 0 : i32
    %c0_i32_0 = arith.constant 0 : i32
    %c0_i32_1 = arith.constant 0 : i32
    return %c0_i32, %c0_i32_0 : i32, i32
  }
  func.func @transform_3(%arg0: i32) -> (i32, i32) {
    %c0_i32 = arith.constant 0 : i32
    %c0_i32_0 = arith.constant 0 : i32
    %c0_i32_1 = arith.constant 0 : i32
    return %c0_i32, %c0_i32_0 : i32, i32
  }
  func.func @transform_4(%arg0: i32) -> (i32, i32) {
    %c0_i32 = arith.constant 0 : i32
    %c0_i32_0 = arith.constant 0 : i32
    %c0_i32_1 = arith.constant 0 : i32
    return %c0_i32, %c0_i32_0 : i32, i32
  }
  func.func @transform_5(%arg0: i32) -> (i32, i32) {
    %c0_i32 = arith.constant 0 : i32
    %c0_i32_0 = arith.constant 0 : i32
    %c0_i32_1 = arith.constant 0 : i32
    return %c0_i32, %c0_i32_0 : i32, i32
  }
  func.func @transform_6(%arg0: i32) -> (i32, i32) {
    %c0_i32 = arith.constant 0 : i32
    %c0_i32_0 = arith.constant 0 : i32
    %c0_i32_1 = arith.constant 0 : i32
    return %c0_i32, %c0_i32_0 : i32, i32
  }
  func.func @transform_7(%arg0: i32) -> (i32, i32) {
    %c0_i32 = arith.constant 0 : i32
    %c0_i32_0 = arith.constant 0 : i32
    %c0_i32_1 = arith.constant 0 : i32
    return %c0_i32, %c0_i32_0 : i32, i32
  }
  func.func @transform_8(%arg0: i32) -> (i32, i32) {
    %c0_i32 = arith.constant 0 : i32
    %c0_i32_0 = arith.constant 0 : i32
    %c0_i32_1 = arith.constant 0 : i32
    return %c0_i32, %c0_i32_0 : i32, i32
  }
  func.func @transform_9(%arg0: i32) -> (i32, i32) {
    %c0_i32 = arith.constant 0 : i32
    %c0_i32_0 = arith.constant 0 : i32
    %c0_i32_1 = arith.constant 0 : i32
    return %c0_i32, %c0_i32_0 : i32, i32
  }
  func.func @transform_10(%arg0: i32) -> (i32, i32, i32) {
    %c0_i32 = arith.constant 0 : i32
    %c0_i32_0 = arith.constant 0 : i32
    %c0_i32_1 = arith.constant 0 : i32
    return %arg0, %c0_i32, %c0_i32_0 : i32, i32, i32
  }
}

</mosaic_0001>

<llo_original>
// kernel: resnet_block_forward.1
$region0: #{resnet_block_forward.1}
  #allocation0 [shape = 'u32[]', space=smem, size = 0x4, offset = 0x4, fixed_abs, tag = 'smem constant byte address 0x4 - core index']
  #allocation1 [shape = 'u32[144,128]{1,0:T(1,128)}', space=vmem, size = 0x12000, scoped, tag = 'internal scratch']
  %s0 = inlined_call_operand.vmem [shape: f32[2,16,256], index: 0, kind: input, shape index: {}]
  %s1 = inlined_call_operand.vmem [shape: f32[2,32,1], index: 1, kind: input, shape index: {}]
  %s2 = inlined_call_operand.vmem [shape: f32[9,256], index: 2, kind: input, shape index: {}]
  %s3 = inlined_call_operand.vmem [shape: f32[16,2], index: 3, kind: input, shape index: {}]
  %s4 = inlined_call_operand.vmem [shape: f32[32,3], index: 4, kind: input, shape index: {}]
  %s5 = inlined_call_operand.vmem [shape: f32[16,16], index: 5, kind: input, shape index: {}]
  %s6 = inlined_call_operand.vmem [shape: f32[32,32], index: 6, kind: input, shape index: {}]
  %s7 = inlined_call_operand.vmem [shape: f32[32,144], index: 7, kind: input, shape index: {}]
  %s8 = inlined_call_operand.vmem [shape: f32[32,288], index: 8, kind: input, shape index: {}]
  %s9 = inlined_call_operand.vmem [shape: f32[32,16], index: 9, kind: input, shape index: {}]
  %s10 = inlined_call_operand.vmem [shape: f32[2,32,256], index: 10, kind: output, shape index: {}]
  %s11 = sld [smem:[#allocation0]]
  $region73: #{resnet_block_forward.1} parent=0
    _
  %s13 = ssub.s32 1, %s11
  %s14 = scalar_select 0, %s13, %s11
  loop: start=0, step=1, limit=4
  $region2: #{resnet_block_forward.1} parent=0 // loop_pre_header
    _
  $region3: #{resnet_block_forward.1} parent=0 // loop_header
    %s16 = sphi 0, %s20
    %p17 = scmp.ge.s32.totalorder %s16, 4
    %s26 = sphi 0, %s28
    %s29 = sphi 0, %s26
    %s30 = sphi 0, %s29
    %s46 = sphi 0, %s30
    %s52 = sphi 0, %s54
    %s55 = sphi 0, %s52
    %s56 = sphi 0, %s55
    %s72 = sphi 0, %s56
    %s76 = sphi 0, %s76
    %s78 = sphi 0, %s76
    %s79 = sphi 0, %s78
    %s93 = sphi 0, %s79
    %s97 = sphi 0, %s97
    %s99 = sphi 0, %s97
    %s100 = sphi 0, %s99
    %s114 = sphi 0, %s100
    %s118 = sphi 0, %s118
    %s120 = sphi 0, %s118
    %s121 = sphi 0, %s120
    %s135 = sphi 0, %s121
    %s139 = sphi 0, %s139
    %s141 = sphi 0, %s139
    %s142 = sphi 0, %s141
    %s156 = sphi 0, %s142
    %s160 = sphi 0, %s160
    %s162 = sphi 0, %s160
    %s163 = sphi 0, %s162
    %s177 = sphi 0, %s163
    %s181 = sphi 0, %s181
    %s183 = sphi 0, %s181
    %s184 = sphi 0, %s183
    %s198 = sphi 0, %s184
    %s202 = sphi 0, %s202
    %s204 = sphi 0, %s202
    %s205 = sphi 0, %s204
    %s219 = sphi 0, %s205
    %s223 = sphi 0, %s223
    %s225 = sphi 0, %s223
    %s226 = sphi 0, %s225
    %s240 = sphi 0, %s226
    %s246 = sphi 0, %s248
    %s249 = sphi 0, %s246
    %s250 = sphi 0, %s249
    %s266 = sphi 0, %s250
  $region4: #{resnet_block_forward.1} parent=0 // loop_header_branch
    %19 = sbr.rel (%p17) target = $region8
  $region5: #{resnet_block_forward.1} parent=0 // loop_body
    %s21 = ssub.s32 %s16, 1
    %s22 = ssub.s32 %s16, 2
    %s23 = sadd.s32 %s16, 1
    %s24 = ssub.s32 %s16, %s23
    %p25 = scmp.eq.s32.totalorder %s24, 0
    %s27 = sadd.s32 %s26, 1
    %s28 = scalar_select %p25, %s26, %s27
    %p31 = pneg %p25
    %p32 = scmp.eq.s32.totalorder %s16, 1
    %p33 = por %p31, %p32
    %p34 = scmp.ne.s32.totalorder %s26, %s29
    %p35 = scmp.eq.s32.totalorder %s16, 0
    %p36 = por %p34, %p35
    %p37 = scmp.ne.s32.totalorder %s26, %s29
    %p38 = scmp.eq.s32.totalorder %s21, 1
    %p39 = por %p37, %p38
    %p40 = scmp.ne.s32.totalorder %s29, %s30
    %p41 = scmp.eq.s32.totalorder %s21, 0
    %p42 = por %p40, %p41
    %p43 = scmp.ne.s32.totalorder %s29, %s30
    %p44 = scmp.eq.s32.totalorder %s22, 1
    %p45 = por %p43, %p44
    %p47 = scmp.ne.s32.totalorder %s30, %s46
    %p48 = scmp.eq.s32.totalorder %s22, 0
    %p49 = por %p47, %p48
    %s50 = ssub.s32 %s16, %s23
    %p51 = scmp.eq.s32.totalorder %s50, 0
    %s53 = sadd.s32 %s52, 1
    %s54 = scalar_select %p51, %s52, %s53
    %p57 = pneg %p51
    %p58 = scmp.eq.s32.totalorder %s16, 1
    %p59 = por %p57, %p58
    %p60 = scmp.ne.s32.totalorder %s52, %s55
    %p61 = scmp.eq.s32.totalorder %s16, 0
    %p62 = por %p60, %p61
    %p63 = scmp.ne.s32.totalorder %s52, %s55
    %p64 = scmp.eq.s32.totalorder %s21, 1
    %p65 = por %p63, %p64
    %p66 = scmp.ne.s32.totalorder %s55, %s56
    %p67 = scmp.eq.s32.totalorder %s21, 0
    %p68 = por %p66, %p67
    %p69 = scmp.ne.s32.totalorder %s55, %s56
    %p70 = scmp.eq.s32.totalorder %s22, 1
    %p71 = por %p69, %p70
    %p73 = scmp.ne.s32.totalorder %s56, %s72
    %p74 = scmp.eq.s32.totalorder %s22, 0
    %p75 = por %p73, %p74
    %s77 = sadd.s32 %s76, 1
    %p80 = scmp.eq.s32.totalorder %s16, 1
    %p81 = scmp.ne.s32.totalorder %s76, %s78
    %p82 = scmp.eq.s32.totalorder %s16, 0
    %p83 = por %p81, %p82
    %p84 = scmp.ne.s32.totalorder %s76, %s78
    %p85 = scmp.eq.s32.totalorder %s21, 1
    %p86 = por %p84, %p85
    %p87 = scmp.ne.s32.totalorder %s78, %s79
    %p88 = scmp.eq.s32.totalorder %s21, 0
    %p89 = por %p87, %p88
    %p90 = scmp.ne.s32.totalorder %s78, %s79
    %p91 = scmp.eq.s32.totalorder %s22, 1
    %p92 = por %p90, %p91
    %p94 = scmp.ne.s32.totalorder %s79, %s93
    %p95 = scmp.eq.s32.totalorder %s22, 0
    %p96 = por %p94, %p95
    %s98 = sadd.s32 %s97, 1
    %p101 = scmp.eq.s32.totalorder %s16, 1
    %p102 = scmp.ne.s32.totalorder %s97, %s99
    %p103 = scmp.eq.s32.totalorder %s16, 0
    %p104 = por %p102, %p103
    %p105 = scmp.ne.s32.totalorder %s97, %s99
    %p106 = scmp.eq.s32.totalorder %s21, 1
    %p107 = por %p105, %p106
    %p108 = scmp.ne.s32.totalorder %s99, %s100
    %p109 = scmp.eq.s32.totalorder %s21, 0
    %p110 = por %p108, %p109
    %p111 = scmp.ne.s32.totalorder %s99, %s100
    %p112 = scmp.eq.s32.totalorder %s22, 1
    %p113 = por %p111, %p112
    %p115 = scmp.ne.s32.totalorder %s100, %s114
    %p116 = scmp.eq.s32.totalorder %s22, 0
    %p117 = por %p115, %p116
    %s119 = sadd.s32 %s118, 1
    %p122 = scmp.eq.s32.totalorder %s16, 1
    %p123 = scmp.ne.s32.totalorder %s118, %s120
    %p124 = scmp.eq.s32.totalorder %s16, 0
    %p125 = por %p123, %p124
    %p126 = scmp.ne.s32.totalorder %s118, %s120
    %p127 = scmp.eq.s32.totalorder %s21, 1
    %p128 = por %p126, %p127
    %p129 = scmp.ne.s32.totalorder %s120, %s121
    %p130 = scmp.eq.s32.totalorder %s21, 0
    %p131 = por %p129, %p130
    %p132 = scmp.ne.s32.totalorder %s120, %s121
    %p133 = scmp.eq.s32.totalorder %s22, 1
    %p134 = por %p132, %p133
    %p136 = scmp.ne.s32.totalorder %s121, %s135
    %p137 = scmp.eq.s32.totalorder %s22, 0
    %p138 = por %p136, %p137
    %s140 = sadd.s32 %s139, 1
    %p143 = scmp.eq.s32.totalorder %s16, 1
    %p144 = scmp.ne.s32.totalorder %s139, %s141
    %p145 = scmp.eq.s32.totalorder %s16, 0
    %p146 = por %p144, %p145
    %p147 = scmp.ne.s32.totalorder %s139, %s141
    %p148 = scmp.eq.s32.totalorder %s21, 1
    %p149 = por %p147, %p148
    %p150 = scmp.ne.s32.totalorder %s141, %s142
    %p151 = scmp.eq.s32.totalorder %s21, 0
    %p152 = por %p150, %p151
    %p153 = scmp.ne.s32.totalorder %s141, %s142
    %p154 = scmp.eq.s32.totalorder %s22, 1
    %p155 = por %p153, %p154
    %p157 = scmp.ne.s32.totalorder %s142, %s156
    %p158 = scmp.eq.s32.totalorder %s22, 0
    %p159 = por %p157, %p158
    %s161 = sadd.s32 %s160, 1
    %p164 = scmp.eq.s32.totalorder %s16, 1
    %p165 = scmp.ne.s32.totalorder %s160, %s162
    %p166 = scmp.eq.s32.totalorder %s16, 0
    %p167 = por %p165, %p166
    %p168 = scmp.ne.s32.totalorder %s160, %s162
    %p169 = scmp.eq.s32.totalorder %s21, 1
    %p170 = por %p168, %p169
    %p171 = scmp.ne.s32.totalorder %s162, %s163
    %p172 = scmp.eq.s32.totalorder %s21, 0
    %p173 = por %p171, %p172
    %p174 = scmp.ne.s32.totalorder %s162, %s163
    %p175 = scmp.eq.s32.totalorder %s22, 1
    %p176 = por %p174, %p175
    %p178 = scmp.ne.s32.totalorder %s163, %s177
    %p179 = scmp.eq.s32.totalorder %s22, 0
    %p180 = por %p178, %p179
    %s182 = sadd.s32 %s181, 1
    %p185 = scmp.eq.s32.totalorder %s16, 1
    %p186 = scmp.ne.s32.totalorder %s181, %s183
    %p187 = scmp.eq.s32.totalorder %s16, 0
    %p188 = por %p186, %p187
    %p189 = scmp.ne.s32.totalorder %s181, %s183
    %p190 = scmp.eq.s32.totalorder %s21, 1
    %p191 = por %p189, %p190
    %p192 = scmp.ne.s32.totalorder %s183, %s184
    %p193 = scmp.eq.s32.totalorder %s21, 0
    %p194 = por %p192, %p193
    %p195 = scmp.ne.s32.totalorder %s183, %s184
    %p196 = scmp.eq.s32.totalorder %s22, 1
    %p197 = por %p195, %p196
    %p199 = scmp.ne.s32.totalorder %s184, %s198
    %p200 = scmp.eq.s32.totalorder %s22, 0
    %p201 = por %p199, %p200
    %s203 = sadd.s32 %s202, 1
    %p206 = scmp.eq.s32.totalorder %s16, 1
    %p207 = scmp.ne.s32.totalorder %s202, %s204
    %p208 = scmp.eq.s32.totalorder %s16, 0
    %p209 = por %p207, %p208
    %p210 = scmp.ne.s32.totalorder %s202, %s204
    %p211 = scmp.eq.s32.totalorder %s21, 1
    %p212 = por %p210, %p211
    %p213 = scmp.ne.s32.totalorder %s204, %s205
    %p214 = scmp.eq.s32.totalorder %s21, 0
    %p215 = por %p213, %p214
    %p216 = scmp.ne.s32.totalorder %s204, %s205
    %p217 = scmp.eq.s32.totalorder %s22, 1
    %p218 = por %p216, %p217
    %p220 = scmp.ne.s32.totalorder %s205, %s219
    %p221 = scmp.eq.s32.totalorder %s22, 0
    %p222 = por %p220, %p221
    %s224 = sadd.s32 %s223, 1
    %p227 = scmp.eq.s32.totalorder %s16, 1
    %p228 = scmp.ne.s32.totalorder %s223, %s225
    %p229 = scmp.eq.s32.totalorder %s16, 0
    %p230 = por %p228, %p229
    %p231 = scmp.ne.s32.totalorder %s223, %s225
    %p232 = scmp.eq.s32.totalorder %s21, 1
    %p233 = por %p231, %p232
    %p234 = scmp.ne.s32.totalorder %s225, %s226
    %p235 = scmp.eq.s32.totalorder %s21, 0
    %p236 = por %p234, %p235
    %p237 = scmp.ne.s32.totalorder %s225, %s226
    %p238 = scmp.eq.s32.totalorder %s22, 1
    %p239 = por %p237, %p238
    %p241 = scmp.ne.s32.totalorder %s226, %s240
    %p242 = scmp.eq.s32.totalorder %s22, 0
    %p243 = por %p241, %p242
    %s244 = ssub.s32 %s16, %s23
    %p245 = scmp.eq.s32.totalorder %s244, 0
    %s247 = sadd.s32 %s246, 1
    %s248 = scalar_select %p245, %s246, %s247
    %p251 = pneg %p245
    %p252 = scmp.eq.s32.totalorder %s16, 1
    %p253 = por %p251, %p252
    %p254 = scmp.ne.s32.totalorder %s246, %s249
    %p255 = scmp.eq.s32.totalorder %s16, 0
    %p256 = por %p254, %p255
    %p257 = scmp.ne.s32.totalorder %s246, %s249
    %p258 = scmp.eq.s32.totalorder %s21, 1
    %p259 = por %p257, %p258
    %p260 = scmp.ne.s32.totalorder %s249, %s250
    %p261 = scmp.eq.s32.totalorder %s21, 0
    %p262 = por %p260, %p261
    %p263 = scmp.ne.s32.totalorder %s249, %s250
    %p264 = scmp.eq.s32.totalorder %s22, 1
    %p265 = por %p263, %p264
    %p267 = scmp.ne.s32.totalorder %s250, %s266
    %p268 = scmp.eq.s32.totalorder %s22, 0
    %p269 = por %p267, %p268
    %p270 = scmp.le.s32.totalorder 1, %s16
    %p271 = scmp.lt.s32.totalorder %s16, 3
    %p272 = pnand %p270, %p271
    %p273 = pneg %p272
    // Predicated region
    $region9: #{resnet_block_forward.1} parent=5 // pred_check
      _
    $region10: #{resnet_block_forward.1} parent=5 // pred_check_branch
      %275 = sbr.rel (%p272) target = $region12
    $region11: #{resnet_block_forward.1} parent=5 // pred_region
      %s276 = ssub.s32 %s16, 1
      // Predicated region
      $region13: #{resnet_block_forward.1} parent=11 // pred_check
        %p277 = pneg %p89
      $region14: #{resnet_block_forward.1} parent=11 // pred_check_branch
        %279 = sbr.rel (%p277) target = $region16
      $region15: #{resnet_block_forward.1} parent=11 // pred_region
        _
      $region16: #{resnet_block_forward.1} parent=11 // pred_fallthru
        _
      // Predicated region
      $region17: #{resnet_block_forward.1} parent=11 // pred_check
        %p280 = pneg %p110
      $region18: #{resnet_block_forward.1} parent=11 // pred_check_branch
        %282 = sbr.rel (%p280) target = $region20
      $region19: #{resnet_block_forward.1} parent=11 // pred_region
        _
      $region20: #{resnet_block_forward.1} parent=11 // pred_fallthru
        _
      // Predicated region
      $region21: #{resnet_block_forward.1} parent=11 // pred_check
        %p283 = pneg %p131
      $region22: #{resnet_block_forward.1} parent=11 // pred_check_branch
        %285 = sbr.rel (%p283) target = $region24
      $region23: #{resnet_block_forward.1} parent=11 // pred_region
        _
      $region24: #{resnet_block_forward.1} parent=11 // pred_fallthru
        _
      // Predicated region
      $region25: #{resnet_block_forward.1} parent=11 // pred_check
        %p286 = pneg %p152
      $region26: #{resnet_block_forward.1} parent=11 // pred_check_branch
        %288 = sbr.rel (%p286) target = $region28
      $region27: #{resnet_block_forward.1} parent=11 // pred_region
        _
      $region28: #{resnet_block_forward.1} parent=11 // pred_fallthru
        _
      // Predicated region
      $region29: #{resnet_block_forward.1} parent=11 // pred_check
        %p289 = pneg %p173
      $region30: #{resnet_block_forward.1} parent=11 // pred_check_branch
        %291 = sbr.rel (%p289) target = $region32
      $region31: #{resnet_block_forward.1} parent=11 // pred_region
        _
      $region32: #{resnet_block_forward.1} parent=11 // pred_fallthru
        _
      // Predicated region
      $region33: #{resnet_block_forward.1} parent=11 // pred_check
        %p292 = pneg %p194
      $region34: #{resnet_block_forward.1} parent=11 // pred_check_branch
        %294 = sbr.rel (%p292) target = $region36
      $region35: #{resnet_block_forward.1} parent=11 // pred_region
        _
      $region36: #{resnet_block_forward.1} parent=11 // pred_fallthru
        _
      // Predicated region
      $region37: #{resnet_block_forward.1} parent=11 // pred_check
        %p295 = pneg %p215
      $region38: #{resnet_block_forward.1} parent=11 // pred_check_branch
        %297 = sbr.rel (%p295) target = $region40
      $region39: #{resnet_block_forward.1} parent=11 // pred_region
        _
      $region40: #{resnet_block_forward.1} parent=11 // pred_fallthru
        _
      // Predicated region
      $region41: #{resnet_block_forward.1} parent=11 // pred_check
        %p298 = pneg %p236
      $region42: #{resnet_block_forward.1} parent=11 // pred_check_branch
        %300 = sbr.rel (%p298) target = $region44
      $region43: #{resnet_block_forward.1} parent=11 // pred_region
        _
      $region44: #{resnet_block_forward.1} parent=11 // pred_fallthru
        _
    $region12: #{resnet_block_forward.1} parent=5 // pred_fallthru
      _
    %p301 = scmp.lt.s32.totalorder %s16, 2
    // Predicated region
    $region45: #{resnet_block_forward.1} parent=5 // pred_check
      %p302 = pneg %p301
    $region46: #{resnet_block_forward.1} parent=5 // pred_check_branch
      %304 = sbr.rel (%p302) target = $region48
    $region47: #{resnet_block_forward.1} parent=5 // pred_region
      // Predicated region
      $region49: #{resnet_block_forward.1} parent=47 // pred_check
        %p305 = pneg %p36
      $region50: #{resnet_block_forward.1} parent=47 // pred_check_branch
        %307 = sbr.rel (%p305) target = $region52
      $region51: #{resnet_block_forward.1} parent=47 // pred_region
        %p308 = scmp.lt.s32.totalorder %s16, 1
        %s309 = scalar_select %p308, %s16, 1
        %s310 = smul.addr %s309, 4
        %s311 = smul.addr %s310, 8
        %s312 = scalar_lea.vmem %s0, %s311
      $region52: #{resnet_block_forward.1} parent=47 // pred_fallthru
        _
      // Predicated region
      $region53: #{resnet_block_forward.1} parent=47 // pred_check
        %p313 = pneg %p62
      $region54: #{resnet_block_forward.1} parent=47 // pred_check_branch
        %315 = sbr.rel (%p313) target = $region56
      $region55: #{resnet_block_forward.1} parent=47 // pred_region
        %p316 = scmp.lt.s32.totalorder %s16, 1
        %s317 = scalar_select %p316, %s16, 1
        %s318 = smul.addr %s317, 4
        %s319 = smul.addr %s318, 8
        %s320 = scalar_lea.vmem %s1, %s319
      $region56: #{resnet_block_forward.1} parent=47 // pred_fallthru
        _
    $region48: #{resnet_block_forward.1} parent=5 // pred_fallthru
      _
    %p321 = scmp.le.s32.totalorder 1, %s16
    %p322 = scmp.lt.s32.totalorder %s16, 3
    %p323 = pnand %p321, %p322
    %p324 = pneg %p323
    // Predicated region
    $region57: #{resnet_block_forward.1} parent=5 // pred_check
      _
    $region58: #{resnet_block_forward.1} parent=5 // pred_check_branch
      %326 = sbr.rel (%p323) target = $region60
    $region59: #{resnet_block_forward.1} parent=5 // pred_region
      %s327 = ssub.s32 %s16, 1
      %p328 = scmp.lt.s32.totalorder %s21, 1
      %s329 = scalar_select %p328, %s21, 1
      %s330 = smul.addr %s329, 4
      %s331 = smul.addr %s330, 8
      %s332 = scalar_lea.vmem %s0, %s331
      %p333 = pneg %p42
      %p334 = pneg %p39
      %p335 = scmp.lt.s32.totalorder %s21, 1
      %s336 = scalar_select %p335, %s21, 1
      %s337 = smul.addr %s336, 4
      %s338 = smul.addr %s337, 8
      %s339 = scalar_lea.vmem %s1, %s338
      %p340 = pneg %p68
      %p341 = pneg %p65
      %p342 = pneg %p89
      %p343 = pneg %p86
      %p344 = pneg %p110
      %p345 = pneg %p107
      %p346 = pneg %p131
      %p347 = pneg %p128
      %p348 = pneg %p152
      %p349 = pneg %p149
      %p350 = pneg %p173
      %p351 = pneg %p170
      %p352 = pneg %p194
      %p353 = pneg %p191
      %p354 = pneg %p215
      %p355 = pneg %p212
      %p356 = pneg %p236
      %p357 = pneg %p233
      %p358 = pneg %p262
      %p359 = pneg %p259
      %p360 = scmp.lt.s32.totalorder %s21, 1
      %s361 = scalar_select %p360, %s21, 1
      %s362 = smul.addr %s361, 8
      %s363 = smul.addr %s362, 8
      %s364 = scalar_lea.vmem %s10, %s363
      %p365 = scmp.lt.s32.totalorder %s21, 1
      %s366 = scalar_select %p365, %s21, 1
      %s367 = smul.addr %s366, 4
      %s368 = smul.addr %s367, 8
      %s369 = scalar_lea.vmem %s0, %s368
      %p370 = scmp.lt.s32.totalorder %s21, 1
      %s371 = scalar_select %p370, %s21, 1
      %s372 = smul.addr %s371, 4
      %s373 = smul.addr %s372, 8
      %s374 = scalar_lea.vmem %s1, %s373
      %p375 = scmp.lt.s32.totalorder %s21, 1
      %s376 = scalar_select %p375, %s21, 1
      %s377 = smul.addr %s376, 8
      %s378 = smul.addr %s377, 8
      %s379 = scalar_lea.vmem %s10, %s378
      %v380 = vld [vmem:[%s369] sm:$0xff]
      %v381 = vld [vmem:[%s369 + $0x8] sm:$0xff]
      %v382 = vld [vmem:[%s369 + $0x10] sm:$0xff]
      %v383 = vld [vmem:[%s369 + $0x18] sm:$0xff]
      %v384 = vld [vmem:[%s3] sm:$0xff]
      %v385 = vld [vmem:[%s3 + $0x8] sm:$0xff]
      %v386 = vld [vmem:[%s4] sm:$0xff]
      %v387 = vld [vmem:[%s4 + $0x8] sm:$0xff]
      %v388 = vld [vmem:[%s4 + $0x10] sm:$0xff]
      %v389 = vld [vmem:[%s4 + $0x18] sm:$0xff]
      %v390 = vadd.f32 %v380, %v381
      %391 = vadd.xlane.f32.xlu0 %v390
      %v392 = vpop.xlane.xlu0 %391
      %v393 = vadd.f32 %v382, %v383
      %394 = vadd.xlane.f32.xlu0 %v393
      %v395 = vpop.xlane.xlu0 %394
      %v396 = vmul.f32 %v380, %v380
      %v397 = vmul.f32 %v381, %v381
      %v398 = vmul.f32 %v382, %v382
      %v399 = vmul.f32 %v383, %v383
      %v400 = vadd.f32 %v396, %v397
      %401 = vadd.xlane.f32.xlu0 %v400
      %v402 = vpop.xlane.xlu0 %401
      %v403 = vadd.f32 %v398, %v399
      %404 = vadd.xlane.f32.xlu0 %v403
      %v405 = vpop.xlane.xlu0 %404
      %vm406 = vcmask 7168
      %v407 = vsel %vm406, %v392, %v402
      %v408 = vsel %vm406, %v395, %v405
      %v409 = vld [vmem:[%s5] sm:$0xff]
      %v410 = vld [vmem:[%s5 + $0x8] sm:$0xff]
      %vm411 = vcmask 130048
      %v413 = vsel %vm411, %v409, 0
      %v416 = vsel %vm411, %v410, 0
      %418 = vmatprep.subr.mxu0 0.0
      %419 = vmatpush1.msra.mxu0 %v407
      %420 = vmatprep.subr.mxu0 0.0
      %421 = vmatpush1.msra.mxu0 %v408
      %422 = vmatprep.subr.mxu0 0.0
      %423 = vmatpush1.msra.mxu0 0.0
      %424 = vmatprep.subr.mxu0 0.0
      %425 = vmatpush1.msra.mxu0 0.0
      %426 = vmatprep.subr.mxu0 0.0
      %427 = vmatpush1.msra.mxu0 0.0
      %428 = vmatprep.subr.mxu0 0.0
      %429 = vmatpush1.msra.mxu0 0.0
      %430 = vmatprep.subr.mxu0 0.0
      %431 = vmatpush1.msra.mxu0 0.0
      %432 = vmatprep.subr.mxu0 0.0
      %433 = vmatpush1.msra.mxu0 0.0
      %434 = vmatprep.subr.mxu0 0.0
      %435 = vmatpush1.msra.mxu0 0.0
      %436 = vmatprep.subr.mxu0 0.0
      %437 = vmatpush1.msra.mxu0 0.0
      %438 = vmatprep.subr.mxu0 0.0
      %439 = vmatpush1.msra.mxu0 0.0
      %440 = vmatprep.subr.mxu0 0.0
      %441 = vmatpush1.msra.mxu0 0.0
      %442 = vmatprep.subr.mxu0 0.0
      %443 = vmatpush1.msra.mxu0 0.0
      %444 = vmatprep.subr.mxu0 0.0
      %445 = vmatpush1.msra.mxu0 0.0
      %446 = vmatprep.subr.mxu0 0.0
      %447 = vmatpush1.msra.mxu0 0.0
      %448 = vmatprep.subr.mxu0 0.0
      %449 = vmatpush1.msra.mxu0 0.0
      %450 = vmatprep.subr.mxu0 0.0
      %451 = vmatpush1.msra.mxu0 0.0
      %452 = vmatprep.subr.mxu0 0.0
      %453 = vmatpush1.msra.mxu0 0.0
      %454 = vmatprep.subr.mxu0 0.0
      %455 = vmatpush1.msra.mxu0 0.0
      %456 = vmatprep.subr.mxu0 0.0
      %457 = vmatpush1.msra.mxu0 0.0
      %458 = vmatprep.subr.mxu0 0.0
      %459 = vmatpush1.msra.mxu0 0.0
      %460 = vmatprep.subr.mxu0 0.0
      %461 = vmatpush1.msra.mxu0 0.0
      %462 = vmatprep.subr.mxu0 0.0
      %463 = vmatpush1.msra.mxu0 0.0
      %464 = vmatprep.subr.mxu0 0.0
      %465 = vmatpush1.msra.mxu0 0.0
      %466 = vmatprep.subr.mxu0 0.0
      %467 = vmatpush1.msra.mxu0 0.0
      %468 = vmatprep.subr.mxu0 0.0
      %469 = vmatpush1.msra.mxu0 0.0
      %470 = vmatprep.subr.mxu0 0.0
      %471 = vmatpush1.msra.mxu0 0.0
      %472 = vmatprep.subr.mxu0 0.0
      %473 = vmatpush1.msra.mxu0 0.0
      %474 = vmatprep.subr.mxu0 0.0
      %475 = vmatpush1.msra.mxu0 0.0
      %476 = vmatprep.subr.mxu0 0.0
      %477 = vmatpush1.msra.mxu0 0.0
      %478 = vmatprep.subr.mxu0 0.0
      %479 = vmatpush1.msra.mxu0 0.0
      %480 = vmatprep.subr.mxu0 0.0
      %481 = vmatpush1.msra.mxu0 0.0
      %482 = vmatprep.mubr.f32.mxu0 0.0
      %483 = vmatmul.mubr.f32.gmra.mrb[0].mxu0 %v413
      %v484 = vpop.f32.mrb[0].mxu0
      %v485 = vadd.f32 0.0, %v484
      %v486 = vpop.f32.mrb[0].mxu0
      %487 = vmatprep.mubr.f32.mxu0 0.0
      %488 = vmatmul.mubr.f32.gmra.mrb[0].mxu0 %v416
      %v489 = vpop.f32.mrb[0].mxu0
      %v490 = vadd.f32 0.0, %v489
      %v491 = vpop.f32.mrb[0].mxu0
      %492 = vdwg.mxu0
      %v493 = vmul.f32 %v485, %v485
      %v494 = vmul.f32 %v490, %v490
      %497 = vrot.lane.b32.xlu0 %v493, 1
      %v498 = vpop.permute.xlu0 %497
      %499 = vrot.lane.b32.xlu0 %v494, 1
      %v500 = vpop.permute.xlu0 %499
      %v503 = vsub.f32 %v485, %v498
      %v504 = vsub.f32 %v490, %v500
      %v505 = vadd.f32 %v503, 1e-05
      %v506 = vadd.f32 %v504, 1e-05
      %v507 = vrsqrt.pop %v505
      %v508 = vrsqrt.pop %v506
      %511 = vrot.lane.b32.xlu0 %v384, 1
      %v512 = vpop.permute.xlu0 %511
      %513 = vrot.lane.b32.xlu0 %v385, 1
      %v514 = vpop.permute.xlu0 %513
      %v517 = vmul.f32 %v507, %v512
      %v518 = vmul.f32 %v508, %v514
      %521 = vrot.lane.b32.xlu0 %v517, 127
      %v522 = vpop.permute.xlu0 %521
      %523 = vrot.lane.b32.xlu0 %v518, 127
      %v524 = vpop.permute.xlu0 %523
      %v527 = vmul.f32 %v485, %v522
      %v528 = vmul.f32 %v490, %v524
      %531 = vrot.lane.b32.xlu0 %v527, 1
      %v532 = vpop.permute.xlu0 %531
      %533 = vrot.lane.b32.xlu0 %v528, 1
      %v534 = vpop.permute.xlu0 %533
      %v537 = vsub.f32 %v384, %v532
      %v538 = vsub.f32 %v385, %v534
      %539 = vset.pattern.permute.xlu0 1
      %540 = vperm.xlu0 %539, %v517
      %v541 = vpop.permute.xlu0 %540
      %543 = vset.pattern.permute.xlu0 1
      %544 = vperm.xlu0 %543, %v518
      %v545 = vpop.permute.xlu0 %544
      %v547 = vmul.f32 %v380, %v541
      %v548 = vmul.f32 %v381, %v541
      %v549 = vmul.f32 %v382, %v545
      %v550 = vmul.f32 %v383, %v545
      %552 = vset.pattern.permute.xlu0 1
      %553 = vperm.xlu0 %552, %v537
      %v554 = vpop.permute.xlu0 %553
      %557 = vset.pattern.permute.xlu0 1
      %558 = vperm.xlu0 %557, %v538
      %v559 = vpop.permute.xlu0 %558
      %v561 = vadd.f32 %v547, %v554
      %v562 = vadd.f32 %v548, %v554
      %v563 = vadd.f32 %v549, %v559
      %v564 = vadd.f32 %v550, %v559
      %v565 = vxor.u32 %v561, 2147483648
      %v566 = vxor.u32 %v562, 2147483648
      %v567 = vxor.u32 %v563, 2147483648
      %v568 = vxor.u32 %v564, 2147483648
      %v569 = vmul.f32 %v565, 1.442695
      %v570 = vpow.pop %v569
      %v571 = vmul.f32 %v566, 1.442695
      %v572 = vpow.pop %v571
      %v573 = vmul.f32 %v567, 1.442695
      %v574 = vpow.pop %v573
      %v575 = vmul.f32 %v568, 1.442695
      %v576 = vpow.pop %v575
      %v577 = vadd.f32 %v570, 1.0
      %v578 = vadd.f32 %v572, 1.0
      %v579 = vadd.f32 %v574, 1.0
      %v580 = vadd.f32 %v576, 1.0
      %v581 = vrcp.pop %v577
      %v582 = vmul.f32 1.0, %v581
      %v583 = vrcp.pop %v578
      %v584 = vmul.f32 1.0, %v583
      %v585 = vrcp.pop %v579
      %v586 = vmul.f32 1.0, %v585
      %v587 = vrcp.pop %v580
      %v588 = vmul.f32 1.0, %v587
      %v589 = vmul.f32 %v561, %v582
      %v590 = vmul.f32 %v562, %v584
      %v591 = vmul.f32 %v563, %v586
      %v592 = vmul.f32 %v564, %v588
      %593 = vrot.lane.b32.xlu0 %v589, 17
      %v594 = vpop.permute.xlu0 %593
      %595 = vrot.lane.b32.xlu0 %v591, 17
      %v596 = vpop.permute.xlu0 %595
      %597 = vrot.lane.b32.xlu0 %v590, 17
      %v598 = vpop.permute.xlu0 %597
      %599 = vrot.lane.b32.xlu0 %v592, 17
      %v600 = vpop.permute.xlu0 %599
      %v601 = vlaneseq
      %v602 = vand.u32 %v601, 127
      %vm603 = vcmp.lt.s32.totalorder %v602, 17
      %v604 = vsel %vm603, %v594, %v598
      %v605 = vsel %vm603, %v596, %v600
      %v606 = vsel %vm603, %v598, %v594
      %v607 = vsel %vm603, %v600, %v596
      %v608 = vld [vmem:[%s2] ss:$8 sm:$0x3]
      %v610 = vlaneseq
      %v611 = vshrl.u32 %v610, 7
      %v612 = vsub.s32 0, %v611
      %v613 = vrot.slane %v608, %v612
      %v614 = vlaneseq
      %v615 = vshrl.u32 %v614, 7
      %v616 = vsub.s32 1, %v615
      %v617 = vrot.slane %v608, %v616
      %v620 = vmul.f32 %v606, %v613
      %v621 = vmul.f32 %v604, %v617
      %v622 = vmul.f32 %v607, %v613
      %v623 = vmul.f32 %v605, %v617
      %624 = vrot.lane.b32.xlu0 %v589, 16
      %v625 = vpop.permute.xlu0 %624
      %626 = vrot.lane.b32.xlu0 %v591, 16
      %v627 = vpop.permute.xlu0 %626
      %628 = vrot.lane.b32.xlu0 %v590, 16
      %v629 = vpop.permute.xlu0 %628
      %630 = vrot.lane.b32.xlu0 %v592, 16
      %v631 = vpop.permute.xlu0 %630
      %vm632 = vcmp.lt.s32.totalorder %v602, 16
      %v633 = vsel %vm632, %v625, %v629
      %v634 = vsel %vm632, %v627, %v631
      %v635 = vsel %vm632, %v629, %v625
      %v636 = vsel %vm632, %v631, %v627
      %s637 = scalar_lea.vmem %s2, 1
      %v638 = vld [vmem:[%s637] ss:$8 sm:$0x3]
      %v640 = vlaneseq
      %v641 = vshrl.u32 %v640, 7
      %v642 = vsub.s32 0, %v641
      %v643 = vrot.slane %v638, %v642
      %v644 = vlaneseq
      %v645 = vshrl.u32 %v644, 7
      %v646 = vsub.s32 1, %v645
      %v647 = vrot.slane %v638, %v646
      %v650 = vmul.f32 %v635, %v643
      %v651 = vmul.f32 %v633, %v647
      %v652 = vmul.f32 %v636, %v643
      %v653 = vmul.f32 %v634, %v647
      %654 = vrot.lane.b32.xlu0 %v589, 15
      %v655 = vpop.permute.xlu0 %654
      %656 = vrot.lane.b32.xlu0 %v591, 15
      %v657 = vpop.permute.xlu0 %656
      %658 = vrot.lane.b32.xlu0 %v590, 15
      %v659 = vpop.permute.xlu0 %658
      %660 = vrot.lane.b32.xlu0 %v592, 15
      %v661 = vpop.permute.xlu0 %660
      %vm662 = vcmp.lt.s32.totalorder %v602, 15
      %v663 = vsel %vm662, %v655, %v659
      %v664 = vsel %vm662, %v657, %v661
      %v665 = vsel %vm662, %v659, %v655
      %v666 = vsel %vm662, %v661, %v657
      %s667 = scalar_lea.vmem %s2, 2
      %v668 = vld [vmem:[%s667] ss:$8 sm:$0x3]
      %v670 = vlaneseq
      %v671 = vshrl.u32 %v670, 7
      %v672 = vsub.s32 0, %v671
      %v673 = vrot.slane %v668, %v672
      %v674 = vlaneseq
      %v675 = vshrl.u32 %v674, 7
      %v676 = vsub.s32 1, %v675
      %v677 = vrot.slane %v668, %v676
      %v680 = vmul.f32 %v665, %v673
      %v681 = vmul.f32 %v663, %v677
      %v682 = vmul.f32 %v666, %v673
      %v683 = vmul.f32 %v664, %v677
      %684 = vrot.lane.b32.xlu0 %v589, 1
      %v685 = vpop.permute.xlu0 %684
      %686 = vrot.lane.b32.xlu0 %v591, 1
      %v687 = vpop.permute.xlu0 %686
      %688 = vrot.lane.b32.xlu0 %v590, 1
      %v689 = vpop.permute.xlu0 %688
      %690 = vrot.lane.b32.xlu0 %v592, 1
      %v691 = vpop.permute.xlu0 %690
      %vm692 = vcmp.lt.s32.totalorder %v602, 1
      %v693 = vsel %vm692, %v685, %v689
      %v694 = vsel %vm692, %v687, %v691
      %v695 = vsel %vm692, %v689, %v685
      %v696 = vsel %vm692, %v691, %v687
      %s697 = scalar_lea.vmem %s2, 3
      %v698 = vld [vmem:[%s697] ss:$8 sm:$0x3]
      %v700 = vlaneseq
      %v701 = vshrl.u32 %v700, 7
      %v702 = vsub.s32 0, %v701
      %v703 = vrot.slane %v698, %v702
      %v704 = vlaneseq
      %v705 = vshrl.u32 %v704, 7
      %v706 = vsub.s32 1, %v705
      %v707 = vrot.slane %v698, %v706
      %v710 = vmul.f32 %v695, %v703
      %v711 = vmul.f32 %v693, %v707
      %v712 = vmul.f32 %v696, %v703
      %v713 = vmul.f32 %v694, %v707
      %714 = vrot.lane.b32.xlu0 %v589, 127
      %v715 = vpop.permute.xlu0 %714
      %716 = vrot.lane.b32.xlu0 %v591, 127
      %v717 = vpop.permute.xlu0 %716
      %718 = vrot.lane.b32.xlu0 %v590, 127
      %v719 = vpop.permute.xlu0 %718
      %720 = vrot.lane.b32.xlu0 %v592, 127
      %v721 = vpop.permute.xlu0 %720
      %vm722 = vcmp.lt.s32.totalorder %v602, 127
      %v723 = vsel %vm722, %v715, %v719
      %v724 = vsel %vm722, %v717, %v721
      %v725 = vsel %vm722, %v719, %v715
      %v726 = vsel %vm722, %v721, %v717
      %s727 = scalar_lea.vmem %s2, 5
      %v728 = vld [vmem:[%s727] ss:$8 sm:$0x3]
      %v730 = vlaneseq
      %v731 = vshrl.u32 %v730, 7
      %v732 = vsub.s32 0, %v731
      %v733 = vrot.slane %v728, %v732
      %v734 = vlaneseq
      %v735 = vshrl.u32 %v734, 7
      %v736 = vsub.s32 1, %v735
      %v737 = vrot.slane %v728, %v736
      %v740 = vmul.f32 %v723, %v733
      %v741 = vmul.f32 %v725, %v737
      %v742 = vmul.f32 %v724, %v733
      %v743 = vmul.f32 %v726, %v737
      %744 = vrot.lane.b32.xlu0 %v589, 113
      %v745 = vpop.permute.xlu0 %744
      %746 = vrot.lane.b32.xlu0 %v591, 113
      %v747 = vpop.permute.xlu0 %746
      %748 = vrot.lane.b32.xlu0 %v590, 113
      %v749 = vpop.permute.xlu0 %748
      %750 = vrot.lane.b32.xlu0 %v592, 113
      %v751 = vpop.permute.xlu0 %750
      %vm752 = vcmp.lt.s32.totalorder %v602, 113
      %v753 = vsel %vm752, %v745, %v749
      %v754 = vsel %vm752, %v747, %v751
      %v755 = vsel %vm752, %v749, %v745
      %v756 = vsel %vm752, %v751, %v747
      %s757 = scalar_lea.vmem %s2, 6
      %v758 = vld [vmem:[%s757] ss:$8 sm:$0x3]
      %v760 = vlaneseq
      %v761 = vshrl.u32 %v760, 7
      %v762 = vsub.s32 0, %v761
      %v763 = vrot.slane %v758, %v762
      %v764 = vlaneseq
      %v765 = vshrl.u32 %v764, 7
      %v766 = vsub.s32 1, %v765
      %v767 = vrot.slane %v758, %v766
      %v770 = vmul.f32 %v753, %v763
      %v771 = vmul.f32 %v755, %v767
      %v772 = vmul.f32 %v754, %v763
      %v773 = vmul.f32 %v756, %v767
      %774 = vrot.lane.b32.xlu0 %v589, 112
      %v775 = vpop.permute.xlu0 %774
      %776 = vrot.lane.b32.xlu0 %v591, 112
      %v777 = vpop.permute.xlu0 %776
      %778 = vrot.lane.b32.xlu0 %v590, 112
      %v779 = vpop.permute.xlu0 %778
      %780 = vrot.lane.b32.xlu0 %v592, 112
      %v781 = vpop.permute.xlu0 %780
      %vm782 = vcmp.lt.s32.totalorder %v602, 112
      %v783 = vsel %vm782, %v775, %v779
      %v784 = vsel %vm782, %v777, %v781
      %v785 = vsel %vm782, %v779, %v775
      %v786 = vsel %vm782, %v781, %v777
      %s787 = scalar_lea.vmem %s2, 7
      %v788 = vld [vmem:[%s787] ss:$8 sm:$0x3]
      %v790 = vlaneseq
      %v791 = vshrl.u32 %v790, 7
      %v792 = vsub.s32 0, %v791
      %v793 = vrot.slane %v788, %v792
      %v794 = vlaneseq
      %v795 = vshrl.u32 %v794, 7
      %v796 = vsub.s32 1, %v795
      %v797 = vrot.slane %v788, %v796
      %v800 = vmul.f32 %v783, %v793
      %v801 = vmul.f32 %v785, %v797
      %v802 = vmul.f32 %v784, %v793
      %v803 = vmul.f32 %v786, %v797
      %804 = vrot.lane.b32.xlu0 %v589, 111
      %v805 = vpop.permute.xlu0 %804
      %806 = vrot.lane.b32.xlu0 %v591, 111
      %v807 = vpop.permute.xlu0 %806
      %808 = vrot.lane.b32.xlu0 %v590, 111
      %v809 = vpop.permute.xlu0 %808
      %810 = vrot.lane.b32.xlu0 %v592, 111
      %v811 = vpop.permute.xlu0 %810
      %vm812 = vcmp.lt.s32.totalorder %v602, 111
      %v813 = vsel %vm812, %v805, %v809
      %v814 = vsel %vm812, %v807, %v811
      %v815 = vsel %vm812, %v809, %v805
      %v816 = vsel %vm812, %v811, %v807
      %s817 = scalar_lea.vmem %s2, 16
      %v818 = vld [vmem:[%s817] ss:$8 sm:$0x3]
      %v820 = vlaneseq
      %v821 = vshrl.u32 %v820, 7
      %v822 = vsub.s32 0, %v821
      %v823 = vrot.slane %v818, %v822
      %v824 = vlaneseq
      %v825 = vshrl.u32 %v824, 7
      %v826 = vsub.s32 1, %v825
      %v827 = vrot.slane %v818, %v826
      %v830 = vmul.f32 %v813, %v823
      %v831 = vmul.f32 %v815, %v827
      %v832 = vmul.f32 %v814, %v823
      %v833 = vmul.f32 %v816, %v827
      %v834 = vld [vmem:[%s7] sm:$0xff]
      %v835 = vld [vmem:[%s7 + $0x8] sm:$0xff]
      %v836 = vld [vmem:[%s7 + $0x10] sm:$0xff]
      %v837 = vld [vmem:[%s7 + $0x18] sm:$0xff]
      %v838 = vld [vmem:[%s7 + $0x20] sm:$0xff]
      %v839 = vld [vmem:[%s7 + $0x28] sm:$0xff]
      %v840 = vld [vmem:[%s7 + $0x30] sm:$0xff]
      %v841 = vld [vmem:[%s7 + $0x38] sm:$0xff]
      %v842 = vld [vmem:[%s374] sm:$0xff]
      %v843 = vld [vmem:[%s374 + $0x8] sm:$0xff]
      %v844 = vld [vmem:[%s374 + $0x10] sm:$0xff]
      %v845 = vld [vmem:[%s374 + $0x18] sm:$0xff]
      %847 = vset.pattern.permute.xlu0 0
      %848 = vperm.xlu0 %847, %v842
      %v849 = vpop.permute.xlu0 %848
      %852 = vset.pattern.permute.xlu0 0
      %853 = vperm.xlu0 %852, %v843
      %v854 = vpop.permute.xlu0 %853
      %857 = vset.pattern.permute.xlu0 0
      %858 = vperm.xlu0 %857, %v844
      %v859 = vpop.permute.xlu0 %858
      %862 = vset.pattern.permute.xlu0 0
      %863 = vperm.xlu0 %862, %v845
      %v864 = vpop.permute.xlu0 %863
      %v867 = vsel %vm411, %v835, 0
      %v870 = vsel %vm411, %v837, 0
      %v873 = vsel %vm411, %v839, 0
      %v876 = vsel %vm411, %v841, 0
      %878 = vmatprep.subr.mxu0 %v621
      %879 = vmatpush1.msra.mxu0 %v620
      %880 = vmatprep.subr.mxu0 %v623
      %881 = vmatpush1.msra.mxu0 %v622
      %882 = vmatprep.subr.mxu0 %v651
      %883 = vmatpush1.msra.mxu0 %v650
      %884 = vmatprep.subr.mxu0 %v653
      %885 = vmatpush1.msra.mxu0 %v652
      %886 = vmatprep.subr.mxu0 %v681
      %887 = vmatpush1.msra.mxu0 %v680
      %888 = vmatprep.subr.mxu0 %v683
      %889 = vmatpush1.msra.mxu0 %v682
      %890 = vmatprep.subr.mxu0 %v711
      %891 = vmatpush1.msra.mxu0 %v710
      %892 = vmatprep.subr.mxu0 %v713
      %893 = vmatpush1.msra.mxu0 %v712
      %894 = vmatprep.subr.mxu0 %v590
      %895 = vmatpush1.msra.mxu0 %v589
      %896 = vmatprep.subr.mxu0 %v592
      %897 = vmatpush1.msra.mxu0 %v591
      %898 = vmatprep.subr.mxu0 %v741
      %899 = vmatpush1.msra.mxu0 %v740
      %900 = vmatprep.subr.mxu0 %v743
      %901 = vmatpush1.msra.mxu0 %v742
      %902 = vmatprep.subr.mxu0 %v771
      %903 = vmatpush1.msra.mxu0 %v770
      %904 = vmatprep.subr.mxu0 %v773
      %905 = vmatpush1.msra.mxu0 %v772
      %906 = vmatprep.subr.mxu0 %v801
      %907 = vmatpush1.msra.mxu0 %v800
      %908 = vmatprep.subr.mxu0 %v803
      %909 = vmatpush1.msra.mxu0 %v802
      %910 = vmatprep.subr.mxu0 %v831
      %911 = vmatpush1.msra.mxu0 %v830
      %912 = vmatprep.subr.mxu0 %v833
      %913 = vmatpush1.msra.mxu0 %v832
      %914 = vmatprep.subr.mxu0 0.0
      %915 = vmatpush1.msra.mxu0 0.0
      %916 = vmatprep.subr.mxu0 0.0
      %917 = vmatpush1.msra.mxu0 0.0
      %918 = vmatprep.subr.mxu0 0.0
      %919 = vmatpush1.msra.mxu0 0.0
      %920 = vmatprep.subr.mxu0 0.0
      %921 = vmatpush1.msra.mxu0 0.0
      %922 = vmatprep.subr.mxu0 0.0
      %923 = vmatpush1.msra.mxu0 0.0
      %924 = vmatprep.subr.mxu0 0.0
      %925 = vmatpush1.msra.mxu0 0.0
      %926 = vmatprep.subr.mxu0 0.0
      %927 = vmatpush1.msra.mxu0 0.0
      %928 = vmatprep.subr.mxu0 0.0
      %929 = vmatpush1.msra.mxu0 0.0
      %930 = vmatprep.subr.mxu0 0.0
      %931 = vmatpush1.msra.mxu0 0.0
      %932 = vmatprep.subr.mxu0 0.0
      %933 = vmatpush1.msra.mxu0 0.0
      %934 = vmatprep.subr.mxu0 0.0
      %935 = vmatpush1.msra.mxu0 0.0
      %936 = vmatprep.subr.mxu0 0.0
      %937 = vmatpush1.msra.mxu0 0.0
      %938 = vmatprep.subr.mxu0 0.0
      %939 = vmatpush1.msra.mxu0 0.0
      %940 = vmatprep.subr.mxu0 0.0
      %941 = vmatpush1.msra.mxu0 0.0
      %942 = vmatprep.mubr.f32.mxu0 %v867
      %943 = vmatmul.mubr.f32.gmra.mrb[0].mxu0 %v834
      %v944 = vpop.f32.mrb[0].mxu0
      %v945 = vadd.f32 %v849, %v944
      %v946 = vpop.f32.mrb[0].mxu0
      %v947 = vadd.f32 %v849, %v946
      %948 = vmatprep.mubr.f32.mxu0 %v870
      %949 = vmatmul.mubr.f32.gmra.mrb[0].mxu0 %v836
      %v950 = vpop.f32.mrb[0].mxu0
      %v951 = vadd.f32 %v854, %v950
      %v952 = vpop.f32.mrb[0].mxu0
      %v953 = vadd.f32 %v854, %v952
      %954 = vmatprep.mubr.f32.mxu0 %v873
      %955 = vmatmul.mubr.f32.gmra.mrb[0].mxu0 %v838
      %v956 = vpop.f32.mrb[0].mxu0
      %v957 = vadd.f32 %v859, %v956
      %v958 = vpop.f32.mrb[0].mxu0
      %v959 = vadd.f32 %v859, %v958
      %960 = vmatprep.mubr.f32.mxu0 %v876
      %961 = vmatmul.mubr.f32.gmra.mrb[0].mxu0 %v840
      %v962 = vpop.f32.mrb[0].mxu0
      %v963 = vadd.f32 %v864, %v962
      %v964 = vpop.f32.mrb[0].mxu0
      %v965 = vadd.f32 %v864, %v964
      %966 = vdwg.mxu0
      %v967 = vadd.f32 %v945, %v947
      %968 = vadd.xlane.f32.xlu0 %v967
      %v969 = vpop.xlane.xlu0 %968
      %v970 = vadd.f32 %v951, %v953
      %971 = vadd.xlane.f32.xlu0 %v970
      %v972 = vpop.xlane.xlu0 %971
      %v973 = vadd.f32 %v957, %v959
      %974 = vadd.xlane.f32.xlu0 %v973
      %v975 = vpop.xlane.xlu0 %974
      %v976 = vadd.f32 %v963, %v965
      %977 = vadd.xlane.f32.xlu0 %v976
      %v978 = vpop.xlane.xlu0 %977
      %v979 = vmul.f32 %v945, %v945
      %v980 = vmul.f32 %v947, %v947
      %v981 = vmul.f32 %v951, %v951
      %v982 = vmul.f32 %v953, %v953
      %v983 = vmul.f32 %v957, %v957
      %v984 = vmul.f32 %v959, %v959
      %v985 = vmul.f32 %v963, %v963
      %v986 = vmul.f32 %v965, %v965
      %v987 = vadd.f32 %v979, %v980
      %988 = vadd.xlane.f32.xlu0 %v987
      %v989 = vpop.xlane.xlu0 %988
      %v990 = vadd.f32 %v981, %v982
      %991 = vadd.xlane.f32.xlu0 %v990
      %v992 = vpop.xlane.xlu0 %991
      %v993 = vadd.f32 %v983, %v984
      %994 = vadd.xlane.f32.xlu0 %v993
      %v995 = vpop.xlane.xlu0 %994
      %v996 = vadd.f32 %v985, %v986
      %997 = vadd.xlane.f32.xlu0 %v996
      %v998 = vpop.xlane.xlu0 %997
      %v999 = vsel %vm406, %v969, %v989
      %v1000 = vsel %vm406, %v972, %v992
      %v1001 = vsel %vm406, %v975, %v995
      %v1002 = vsel %vm406, %v978, %v998
      %v1003 = vld [vmem:[%s6] sm:$0xff]
      %v1004 = vld [vmem:[%s6 + $0x8] sm:$0xff]
      %v1005 = vld [vmem:[%s6 + $0x10] sm:$0xff]
      %v1006 = vld [vmem:[%s6 + $0x18] sm:$0xff]
      %vm1007 = vcmask 261120
      %v1009 = vsel %vm1007, %v1003, 0
      %v1012 = vsel %vm1007, %v1004, 0
      %v1015 = vsel %vm1007, %v1005, 0
      %v1018 = vsel %vm1007, %v1006, 0
      %1020 = vmatprep.subr.mxu0 0.0
      %1021 = vmatpush1.msra.mxu0 %v999
      %1022 = vmatprep.subr.mxu0 0.0
      %1023 = vmatpush1.msra.mxu0 %v1000
      %1024 = vmatprep.subr.mxu0 0.0
      %1025 = vmatpush1.msra.mxu0 %v1001
      %1026 = vmatprep.subr.mxu0 0.0
      %1027 = vmatpush1.msra.mxu0 %v1002
      %1028 = vmatprep.subr.mxu0 0.0
      %1029 = vmatpush1.msra.mxu0 0.0
      %1030 = vmatprep.subr.mxu0 0.0
      %1031 = vmatpush1.msra.mxu0 0.0
      %1032 = vmatprep.subr.mxu0 0.0
      %1033 = vmatpush1.msra.mxu0 0.0
      %1034 = vmatprep.subr.mxu0 0.0
      %1035 = vmatpush1.msra.mxu0 0.0
      %1036 = vmatprep.subr.mxu0 0.0
      %1037 = vmatpush1.msra.mxu0 0.0
      %1038 = vmatprep.subr.mxu0 0.0
      %1039 = vmatpush1.msra.mxu0 0.0
      %1040 = vmatprep.subr.mxu0 0.0
      %1041 = vmatpush1.msra.mxu0 0.0
      %1042 = vmatprep.subr.mxu0 0.0
      %1043 = vmatpush1.msra.mxu0 0.0
      %1044 = vmatprep.subr.mxu0 0.0
      %1045 = vmatpush1.msra.mxu0 0.0
      %1046 = vmatprep.subr.mxu0 0.0
      %1047 = vmatpush1.msra.mxu0 0.0
      %1048 = vmatprep.subr.mxu0 0.0
      %1049 = vmatpush1.msra.mxu0 0.0
      %1050 = vmatprep.subr.mxu0 0.0
      %1051 = vmatpush1.msra.mxu0 0.0
      %1052 = vmatprep.subr.mxu0 0.0
      %1053 = vmatpush1.msra.mxu0 0.0
      %1054 = vmatprep.subr.mxu0 0.0
      %1055 = vmatpush1.msra.mxu0 0.0
      %1056 = vmatprep.subr.mxu0 0.0
      %1057 = vmatpush1.msra.mxu0 0.0
      %1058 = vmatprep.subr.mxu0 0.0
      %1059 = vmatpush1.msra.mxu0 0.0
      %1060 = vmatprep.subr.mxu0 0.0
      %1061 = vmatpush1.msra.mxu0 0.0
      %1062 = vmatprep.subr.mxu0 0.0
      %1063 = vmatpush1.msra.mxu0 0.0
      %1064 = vmatprep.subr.mxu0 0.0
      %1065 = vmatpush1.msra.mxu0 0.0
      %1066 = vmatprep.subr.mxu0 0.0
      %1067 = vmatpush1.msra.mxu0 0.0
      %1068 = vmatprep.subr.mxu0 0.0
      %1069 = vmatpush1.msra.mxu0 0.0
      %1070 = vmatprep.subr.mxu0 0.0
      %1071 = vmatpush1.msra.mxu0 0.0
      %1072 = vmatprep.subr.mxu0 0.0
      %1073 = vmatpush1.msra.mxu0 0.0
      %1074 = vmatprep.subr.mxu0 0.0
      %1075 = vmatpush1.msra.mxu0 0.0
      %1076 = vmatprep.subr.mxu0 0.0
      %1077 = vmatpush1.msra.mxu0 0.0
      %1078 = vmatprep.subr.mxu0 0.0
      %1079 = vmatpush1.msra.mxu0 0.0
      %1080 = vmatprep.subr.mxu0 0.0
      %1081 = vmatpush1.msra.mxu0 0.0
      %1082 = vmatprep.subr.mxu0 0.0
      %1083 = vmatpush1.msra.mxu0 0.0
      %1084 = vmatprep.mubr.f32.mxu0 0.0
      %1085 = vmatmul.mubr.f32.gmra.mrb[0].mxu0 %v1009
      %v1086 = vpop.f32.mrb[0].mxu0
      %v1087 = vadd.f32 0.0, %v1086
      %v1088 = vpop.f32.mrb[0].mxu0
      %1089 = vmatprep.mubr.f32.mxu0 0.0
      %1090 = vmatmul.mubr.f32.gmra.mrb[0].mxu0 %v1012
      %v1091 = vpop.f32.mrb[0].mxu0
      %v1092 = vadd.f32 0.0, %v1091
      %v1093 = vpop.f32.mrb[0].mxu0
      %1094 = vmatprep.mubr.f32.mxu0 0.0
      %1095 = vmatmul.mubr.f32.gmra.mrb[0].mxu0 %v1015
      %v1096 = vpop.f32.mrb[0].mxu0
      %v1097 = vadd.f32 0.0, %v1096
      %v1098 = vpop.f32.mrb[0].mxu0
      %1099 = vmatprep.mubr.f32.mxu0 0.0
      %1100 = vmatmul.mubr.f32.gmra.mrb[0].mxu0 %v1018
      %v1101 = vpop.f32.mrb[0].mxu0
      %v1102 = vadd.f32 0.0, %v1101
      %v1103 = vpop.f32.mrb[0].mxu0
      %1104 = vdwg.mxu0
      %v1105 = vmul.f32 %v1087, %v1087
      %v1106 = vmul.f32 %v1092, %v1092
      %v1107 = vmul.f32 %v1097, %v1097
      %v1108 = vmul.f32 %v1102, %v1102
      %1113 = vrot.lane.b32.xlu0 %v1105, 1
      %v1114 = vpop.permute.xlu0 %1113
      %1115 = vrot.lane.b32.xlu0 %v1106, 1
      %v1116 = vpop.permute.xlu0 %1115
      %1117 = vrot.lane.b32.xlu0 %v1107, 1
      %v1118 = vpop.permute.xlu0 %1117
      %1119 = vrot.lane.b32.xlu0 %v1108, 1
      %v1120 = vpop.permute.xlu0 %1119
      %v1125 = vsub.f32 %v1087, %v1114
      %v1126 = vsub.f32 %v1092, %v1116
      %v1127 = vsub.f32 %v1097, %v1118
      %v1128 = vsub.f32 %v1102, %v1120
      %v1129 = vadd.f32 %v1125, 1e-05
      %v1130 = vadd.f32 %v1126, 1e-05
      %v1131 = vadd.f32 %v1127, 1e-05
      %v1132 = vadd.f32 %v1128, 1e-05
      %v1133 = vrsqrt.pop %v1129
      %v1134 = vrsqrt.pop %v1130
      %v1135 = vrsqrt.pop %v1131
      %v1136 = vrsqrt.pop %v1132
      %1141 = vrot.lane.b32.xlu0 %v386, 1
      %v1142 = vpop.permute.xlu0 %1141
      %1143 = vrot.lane.b32.xlu0 %v387, 1
      %v1144 = vpop.permute.xlu0 %1143
      %1145 = vrot.lane.b32.xlu0 %v388, 1
      %v1146 = vpop.permute.xlu0 %1145
      %1147 = vrot.lane.b32.xlu0 %v389, 1
      %v1148 = vpop.permute.xlu0 %1147
      %v1153 = vmul.f32 %v1133, %v1142
      %v1154 = vmul.f32 %v1134, %v1144
      %v1155 = vmul.f32 %v1135, %v1146
      %v1156 = vmul.f32 %v1136, %v1148
      %1161 = vrot.lane.b32.xlu0 %v1153, 127
      %v1162 = vpop.permute.xlu0 %1161
      %1163 = vrot.lane.b32.xlu0 %v1154, 127
      %v1164 = vpop.permute.xlu0 %1163
      %1165 = vrot.lane.b32.xlu0 %v1155, 127
      %v1166 = vpop.permute.xlu0 %1165
      %1167 = vrot.lane.b32.xlu0 %v1156, 127
      %v1168 = vpop.permute.xlu0 %1167
      %v1173 = vmul.f32 %v1087, %v1162
      %v1174 = vmul.f32 %v1092, %v1164
      %v1175 = vmul.f32 %v1097, %v1166
      %v1176 = vmul.f32 %v1102, %v1168
      %1181 = vrot.lane.b32.xlu0 %v1173, 1
      %v1182 = vpop.permute.xlu0 %1181
      %1183 = vrot.lane.b32.xlu0 %v1174, 1
      %v1184 = vpop.permute.xlu0 %1183
      %1185 = vrot.lane.b32.xlu0 %v1175, 1
      %v1186 = vpop.permute.xlu0 %1185
      %1187 = vrot.lane.b32.xlu0 %v1176, 1
      %v1188 = vpop.permute.xlu0 %1187
      %v1193 = vsub.f32 %v386, %v1182
      %v1194 = vsub.f32 %v387, %v1184
      %v1195 = vsub.f32 %v388, %v1186
      %v1196 = vsub.f32 %v389, %v1188
      %1197 = vset.pattern.permute.xlu0 1
      %1198 = vperm.xlu0 %1197, %v1153
      %v1199 = vpop.permute.xlu0 %1198
      %1201 = vset.pattern.permute.xlu0 1
      %1202 = vperm.xlu0 %1201, %v1154
      %v1203 = vpop.permute.xlu0 %1202
      %1205 = vset.pattern.permute.xlu0 1
      %1206 = vperm.xlu0 %1205, %v1155
      %v1207 = vpop.permute.xlu0 %1206
      %1209 = vset.pattern.permute.xlu0 1
      %1210 = vperm.xlu0 %1209, %v1156
      %v1211 = vpop.permute.xlu0 %1210
      %v1213 = vmul.f32 %v945, %v1199
      %v1214 = vmul.f32 %v947, %v1199
      %v1215 = vmul.f32 %v951, %v1203
      %v1216 = vmul.f32 %v953, %v1203
      %v1217 = vmul.f32 %v957, %v1207
      %v1218 = vmul.f32 %v959, %v1207
      %v1219 = vmul.f32 %v963, %v1211
      %v1220 = vmul.f32 %v965, %v1211
      %1222 = vset.pattern.permute.xlu0 1
      %1223 = vperm.xlu0 %1222, %v1193
      %v1224 = vpop.permute.xlu0 %1223
      %1227 = vset.pattern.permute.xlu0 1
      %1228 = vperm.xlu0 %1227, %v1194
      %v1229 = vpop.permute.xlu0 %1228
      %1232 = vset.pattern.permute.xlu0 1
      %1233 = vperm.xlu0 %1232, %v1195
      %v1234 = vpop.permute.xlu0 %1233
      %1237 = vset.pattern.permute.xlu0 1
      %1238 = vperm.xlu0 %1237, %v1196
      %v1239 = vpop.permute.xlu0 %1238
      %v1241 = vadd.f32 %v1213, %v1224
      %v1242 = vadd.f32 %v1214, %v1224
      %v1243 = vadd.f32 %v1215, %v1229
      %v1244 = vadd.f32 %v1216, %v1229
      %v1245 = vadd.f32 %v1217, %v1234
      %v1246 = vadd.f32 %v1218, %v1234
      %v1247 = vadd.f32 %v1219, %v1239
      %v1248 = vadd.f32 %v1220, %v1239
      %v1249 = vxor.u32 %v1241, 2147483648
      %v1250 = vxor.u32 %v1242, 2147483648
      %v1251 = vxor.u32 %v1243, 2147483648
      %v1252 = vxor.u32 %v1244, 2147483648
      %v1253 = vxor.u32 %v1245, 2147483648
      %v1254 = vxor.u32 %v1246, 2147483648
      %v1255 = vxor.u32 %v1247, 2147483648
      %v1256 = vxor.u32 %v1248, 2147483648
      %v1257 = vmul.f32 %v1249, 1.442695
      %v1258 = vpow.pop %v1257
      %v1259 = vmul.f32 %v1250, 1.442695
      %v1260 = vpow.pop %v1259
      %v1261 = vmul.f32 %v1251, 1.442695
      %v1262 = vpow.pop %v1261
      %v1263 = vmul.f32 %v1252, 1.442695
      %v1264 = vpow.pop %v1263
      %v1265 = vmul.f32 %v1253, 1.442695
      %v1266 = vpow.pop %v1265
      %v1267 = vmul.f32 %v1254, 1.442695
      %v1268 = vpow.pop %v1267
      %v1269 = vmul.f32 %v1255, 1.442695
      %v1270 = vpow.pop %v1269
      %v1271 = vmul.f32 %v1256, 1.442695
      %v1272 = vpow.pop %v1271
      %v1273 = vadd.f32 %v1258, 1.0
      %v1274 = vadd.f32 %v1260, 1.0
      %v1275 = vadd.f32 %v1262, 1.0
      %v1276 = vadd.f32 %v1264, 1.0
      %v1277 = vadd.f32 %v1266, 1.0
      %v1278 = vadd.f32 %v1268, 1.0
      %v1279 = vadd.f32 %v1270, 1.0
      %v1280 = vadd.f32 %v1272, 1.0
      %v1281 = vrcp.pop %v1273
      %v1282 = vmul.f32 1.0, %v1281
      %v1283 = vrcp.pop %v1274
      %v1284 = vmul.f32 1.0, %v1283
      %v1285 = vrcp.pop %v1275
      %v1286 = vmul.f32 1.0, %v1285
      %v1287 = vrcp.pop %v1276
      %v1288 = vmul.f32 1.0, %v1287
      %v1289 = vrcp.pop %v1277
      %v1290 = vmul.f32 1.0, %v1289
      %v1291 = vrcp.pop %v1278
      %v1292 = vmul.f32 1.0, %v1291
      %v1293 = vrcp.pop %v1279
      %v1294 = vmul.f32 1.0, %v1293
      %v1295 = vrcp.pop %v1280
      %v1296 = vmul.f32 1.0, %v1295
      %v1297 = vmul.f32 %v1241, %v1282
      %v1298 = vmul.f32 %v1242, %v1284
      %v1299 = vmul.f32 %v1243, %v1286
      %v1300 = vmul.f32 %v1244, %v1288
      %v1301 = vmul.f32 %v1245, %v1290
      %v1302 = vmul.f32 %v1246, %v1292
      %v1303 = vmul.f32 %v1247, %v1294
      %v1304 = vmul.f32 %v1248, %v1296
      %1305 = vrot.lane.b32.xlu0 %v1297, 17
      %v1306 = vpop.permute.xlu0 %1305
      %1307 = vrot.lane.b32.xlu0 %v1299, 17
      %v1308 = vpop.permute.xlu0 %1307
      %1309 = vrot.lane.b32.xlu0 %v1301, 17
      %v1310 = vpop.permute.xlu0 %1309
      %1311 = vrot.lane.b32.xlu0 %v1303, 17
      %v1312 = vpop.permute.xlu0 %1311
      %1313 = vrot.lane.b32.xlu0 %v1298, 17
      %v1314 = vpop.permute.xlu0 %1313
      %1315 = vrot.lane.b32.xlu0 %v1300, 17
      %v1316 = vpop.permute.xlu0 %1315
      %1317 = vrot.lane.b32.xlu0 %v1302, 17
      %v1318 = vpop.permute.xlu0 %1317
      %1319 = vrot.lane.b32.xlu0 %v1304, 17
      %v1320 = vpop.permute.xlu0 %1319
      %v1321 = vsel %vm603, %v1306, %v1314
      %v1322 = vsel %vm603, %v1308, %v1316
      %v1323 = vsel %vm603, %v1310, %v1318
      %v1324 = vsel %vm603, %v1312, %v1320
      %v1325 = vsel %vm603, %v1314, %v1306
      %v1326 = vsel %vm603, %v1316, %v1308
      %v1327 = vsel %vm603, %v1318, %v1310
      %v1328 = vsel %vm603, %v1320, %v1312
      %v1329 = vmul.f32 %v1325, %v613
      %v1330 = vmul.f32 %v1321, %v617
      %v1331 = vmul.f32 %v1326, %v613
      %v1332 = vmul.f32 %v1322, %v617
      %v1333 = vmul.f32 %v1327, %v613
      %v1334 = vmul.f32 %v1323, %v617
      %v1335 = vmul.f32 %v1328, %v613
      %v1336 = vmul.f32 %v1324, %v617
      %1337 = vrot.lane.b32.xlu0 %v1297, 16
      %v1338 = vpop.permute.xlu0 %1337
      %1339 = vrot.lane.b32.xlu0 %v1299, 16
      %v1340 = vpop.permute.xlu0 %1339
      %1341 = vrot.lane.b32.xlu0 %v1301, 16
      %v1342 = vpop.permute.xlu0 %1341
      %1343 = vrot.lane.b32.xlu0 %v1303, 16
      %v1344 = vpop.permute.xlu0 %1343
      %1345 = vrot.lane.b32.xlu0 %v1298, 16
      %v1346 = vpop.permute.xlu0 %1345
      %1347 = vrot.lane.b32.xlu0 %v1300, 16
      %v1348 = vpop.permute.xlu0 %1347
      %1349 = vrot.lane.b32.xlu0 %v1302, 16
      %v1350 = vpop.permute.xlu0 %1349
      %1351 = vrot.lane.b32.xlu0 %v1304, 16
      %v1352 = vpop.permute.xlu0 %1351
      %v1353 = vsel %vm632, %v1338, %v1346
      %v1354 = vsel %vm632, %v1340, %v1348
      %v1355 = vsel %vm632, %v1342, %v1350
      %v1356 = vsel %vm632, %v1344, %v1352
      %v1357 = vsel %vm632, %v1346, %v1338
      %v1358 = vsel %vm632, %v1348, %v1340
      %v1359 = vsel %vm632, %v1350, %v1342
      %v1360 = vsel %vm632, %v1352, %v1344
      %v1361 = vmul.f32 %v1357, %v643
      %v1362 = vmul.f32 %v1353, %v647
      %v1363 = vmul.f32 %v1358, %v643
      %v1364 = vmul.f32 %v1354, %v647
      %v1365 = vmul.f32 %v1359, %v643
      %v1366 = vmul.f32 %v1355, %v647
      %v1367 = vmul.f32 %v1360, %v643
      %v1368 = vmul.f32 %v1356, %v647
      %1369 = vrot.lane.b32.xlu0 %v1297, 15
      %v1370 = vpop.permute.xlu0 %1369
      %1371 = vrot.lane.b32.xlu0 %v1299, 15
      %v1372 = vpop.permute.xlu0 %1371
      %1373 = vrot.lane.b32.xlu0 %v1301, 15
      %v1374 = vpop.permute.xlu0 %1373
      %1375 = vrot.lane.b32.xlu0 %v1303, 15
      %v1376 = vpop.permute.xlu0 %1375
      %1377 = vrot.lane.b32.xlu0 %v1298, 15
      %v1378 = vpop.permute.xlu0 %1377
      %1379 = vrot.lane.b32.xlu0 %v1300, 15
      %v1380 = vpop.permute.xlu0 %1379
      %1381 = vrot.lane.b32.xlu0 %v1302, 15
      %v1382 = vpop.permute.xlu0 %1381
      %1383 = vrot.lane.b32.xlu0 %v1304, 15
      %v1384 = vpop.permute.xlu0 %1383
      %v1385 = vsel %vm662, %v1370, %v1378
      %v1386 = vsel %vm662, %v1372, %v1380
      %v1387 = vsel %vm662, %v1374, %v1382
      %v1388 = vsel %vm662, %v1376, %v1384
      %v1389 = vsel %vm662, %v1378, %v1370
      %v1390 = vsel %vm662, %v1380, %v1372
      %v1391 = vsel %vm662, %v1382, %v1374
      %v1392 = vsel %vm662, %v1384, %v1376
      %v1393 = vmul.f32 %v1389, %v673
      %v1394 = vmul.f32 %v1385, %v677
      %v1395 = vmul.f32 %v1390, %v673
      %v1396 = vmul.f32 %v1386, %v677
      %v1397 = vmul.f32 %v1391, %v673
      %v1398 = vmul.f32 %v1387, %v677
      %v1399 = vmul.f32 %v1392, %v673
      %v1400 = vmul.f32 %v1388, %v677
      %1401 = vrot.lane.b32.xlu0 %v1297, 1
      %v1402 = vpop.permute.xlu0 %1401
      %1403 = vrot.lane.b32.xlu0 %v1299, 1
      %v1404 = vpop.permute.xlu0 %1403
      %1405 = vrot.lane.b32.xlu0 %v1301, 1
      %v1406 = vpop.permute.xlu0 %1405
      %1407 = vrot.lane.b32.xlu0 %v1303, 1
      %v1408 = vpop.permute.xlu0 %1407
      %1409 = vrot.lane.b32.xlu0 %v1298, 1
      %v1410 = vpop.permute.xlu0 %1409
      %1411 = vrot.lane.b32.xlu0 %v1300, 1
      %v1412 = vpop.permute.xlu0 %1411
      %1413 = vrot.lane.b32.xlu0 %v1302, 1
      %v1414 = vpop.permute.xlu0 %1413
      %1415 = vrot.lane.b32.xlu0 %v1304, 1
      %v1416 = vpop.permute.xlu0 %1415
      %v1417 = vsel %vm692, %v1402, %v1410
      %v1418 = vsel %vm692, %v1404, %v1412
      %v1419 = vsel %vm692, %v1406, %v1414
      %v1420 = vsel %vm692, %v1408, %v1416
      %v1421 = vsel %vm692, %v1410, %v1402
      %v1422 = vsel %vm692, %v1412, %v1404
      %v1423 = vsel %vm692, %v1414, %v1406
      %v1424 = vsel %vm692, %v1416, %v1408
      %v1425 = vmul.f32 %v1421, %v703
      %v1426 = vmul.f32 %v1417, %v707
      %v1427 = vmul.f32 %v1422, %v703
      %v1428 = vmul.f32 %v1418, %v707
      %v1429 = vmul.f32 %v1423, %v703
      %v1430 = vmul.f32 %v1419, %v707
      %v1431 = vmul.f32 %v1424, %v703
      %v1432 = vmul.f32 %v1420, %v707
      %1433 = vrot.lane.b32.xlu0 %v1297, 127
      %v1434 = vpop.permute.xlu0 %1433
      %1435 = vrot.lane.b32.xlu0 %v1299, 127
      %v1436 = vpop.permute.xlu0 %1435
      %1437 = vrot.lane.b32.xlu0 %v1301, 127
      %v1438 = vpop.permute.xlu0 %1437
      %1439 = vrot.lane.b32.xlu0 %v1303, 127
      %v1440 = vpop.permute.xlu0 %1439
      %1441 = vrot.lane.b32.xlu0 %v1298, 127
      %v1442 = vpop.permute.xlu0 %1441
      %1443 = vrot.lane.b32.xlu0 %v1300, 127
      %v1444 = vpop.permute.xlu0 %1443
      %1445 = vrot.lane.b32.xlu0 %v1302, 127
      %v1446 = vpop.permute.xlu0 %1445
      %1447 = vrot.lane.b32.xlu0 %v1304, 127
      %v1448 = vpop.permute.xlu0 %1447
      %v1449 = vsel %vm722, %v1434, %v1442
      %v1450 = vsel %vm722, %v1436, %v1444
      %v1451 = vsel %vm722, %v1438, %v1446
      %v1452 = vsel %vm722, %v1440, %v1448
      %v1453 = vsel %vm722, %v1442, %v1434
      %v1454 = vsel %vm722, %v1444, %v1436
      %v1455 = vsel %vm722, %v1446, %v1438
      %v1456 = vsel %vm722, %v1448, %v1440
      %v1457 = vmul.f32 %v1449, %v733
      %v1458 = vmul.f32 %v1453, %v737
      %v1459 = vmul.f32 %v1450, %v733
      %v1460 = vmul.f32 %v1454, %v737
      %v1461 = vmul.f32 %v1451, %v733
      %v1462 = vmul.f32 %v1455, %v737
      %v1463 = vmul.f32 %v1452, %v733
      %v1464 = vmul.f32 %v1456, %v737
      %1465 = vrot.lane.b32.xlu0 %v1297, 113
      %v1466 = vpop.permute.xlu0 %1465
      %1467 = vrot.lane.b32.xlu0 %v1299, 113
      %v1468 = vpop.permute.xlu0 %1467
      %1469 = vrot.lane.b32.xlu0 %v1301, 113
      %v1470 = vpop.permute.xlu0 %1469
      %1471 = vrot.lane.b32.xlu0 %v1303, 113
      %v1472 = vpop.permute.xlu0 %1471
      %1473 = vrot.lane.b32.xlu0 %v1298, 113
      %v1474 = vpop.permute.xlu0 %1473
      %1475 = vrot.lane.b32.xlu0 %v1300, 113
      %v1476 = vpop.permute.xlu0 %1475
      %1477 = vrot.lane.b32.xlu0 %v1302, 113
      %v1478 = vpop.permute.xlu0 %1477
      %1479 = vrot.lane.b32.xlu0 %v1304, 113
      %v1480 = vpop.permute.xlu0 %1479
      %v1481 = vsel %vm752, %v1466, %v1474
      %v1482 = vsel %vm752, %v1468, %v1476
      %v1483 = vsel %vm752, %v1470, %v1478
      %v1484 = vsel %vm752, %v1472, %v1480
      %v1485 = vsel %vm752, %v1474, %v1466
      %v1486 = vsel %vm752, %v1476, %v1468
      %v1487 = vsel %vm752, %v1478, %v1470
      %v1488 = vsel %vm752, %v1480, %v1472
      %v1489 = vmul.f32 %v1481, %v763
      %v1490 = vmul.f32 %v1485, %v767
      %v1491 = vmul.f32 %v1482, %v763
      %v1492 = vmul.f32 %v1486, %v767
      %v1493 = vmul.f32 %v1483, %v763
      %v1494 = vmul.f32 %v1487, %v767
      %v1495 = vmul.f32 %v1484, %v763
      %v1496 = vmul.f32 %v1488, %v767
      %1497 = vrot.lane.b32.xlu0 %v1297, 112
      %v1498 = vpop.permute.xlu0 %1497
      %1499 = vrot.lane.b32.xlu0 %v1299, 112
      %v1500 = vpop.permute.xlu0 %1499
      %1501 = vrot.lane.b32.xlu0 %v1301, 112
      %v1502 = vpop.permute.xlu0 %1501
      %1503 = vrot.lane.b32.xlu0 %v1303, 112
      %v1504 = vpop.permute.xlu0 %1503
      %1505 = vrot.lane.b32.xlu0 %v1298, 112
      %v1506 = vpop.permute.xlu0 %1505
      %1507 = vrot.lane.b32.xlu0 %v1300, 112
      %v1508 = vpop.permute.xlu0 %1507
      %1509 = vrot.lane.b32.xlu0 %v1302, 112
      %v1510 = vpop.permute.xlu0 %1509
      %1511 = vrot.lane.b32.xlu0 %v1304, 112
      %v1512 = vpop.permute.xlu0 %1511
      %v1513 = vsel %vm782, %v1498, %v1506
      %v1514 = vsel %vm782, %v1500, %v1508
      %v1515 = vsel %vm782, %v1502, %v1510
      %v1516 = vsel %vm782, %v1504, %v1512
      %v1517 = vsel %vm782, %v1506, %v1498
      %v1518 = vsel %vm782, %v1508, %v1500
      %v1519 = vsel %vm782, %v1510, %v1502
      %v1520 = vsel %vm782, %v1512, %v1504
      %v1521 = vmul.f32 %v1513, %v793
      %v1522 = vmul.f32 %v1517, %v797
      %v1523 = vmul.f32 %v1514, %v793
      %v1524 = vmul.f32 %v1518, %v797
      %v1525 = vmul.f32 %v1515, %v793
      %v1526 = vmul.f32 %v1519, %v797
      %v1527 = vmul.f32 %v1516, %v793
      %v1528 = vmul.f32 %v1520, %v797
      %1529 = vrot.lane.b32.xlu0 %v1297, 111
      %v1530 = vpop.permute.xlu0 %1529
      %1531 = vrot.lane.b32.xlu0 %v1299, 111
      %v1532 = vpop.permute.xlu0 %1531
      %1533 = vrot.lane.b32.xlu0 %v1301, 111
      %v1534 = vpop.permute.xlu0 %1533
      %1535 = vrot.lane.b32.xlu0 %v1303, 111
      %v1536 = vpop.permute.xlu0 %1535
      %1537 = vrot.lane.b32.xlu0 %v1298, 111
      %v1538 = vpop.permute.xlu0 %1537
      %1539 = vrot.lane.b32.xlu0 %v1300, 111
      %v1540 = vpop.permute.xlu0 %1539
      %1541 = vrot.lane.b32.xlu0 %v1302, 111
      %v1542 = vpop.permute.xlu0 %1541
      %1543 = vrot.lane.b32.xlu0 %v1304, 111
      %v1544 = vpop.permute.xlu0 %1543
      %v1545 = vsel %vm812, %v1530, %v1538
      %v1546 = vsel %vm812, %v1532, %v1540
      %v1547 = vsel %vm812, %v1534, %v1542
      %v1548 = vsel %vm812, %v1536, %v1544
      %v1549 = vsel %vm812, %v1538, %v1530
      %v1550 = vsel %vm812, %v1540, %v1532
      %v1551 = vsel %vm812, %v1542, %v1534
      %v1552 = vsel %vm812, %v1544, %v1536
      %v1553 = vmul.f32 %v1545, %v823
      %v1554 = vmul.f32 %v1549, %v827
      %v1555 = vmul.f32 %v1546, %v823
      %v1556 = vmul.f32 %v1550, %v827
      %v1557 = vmul.f32 %v1547, %v823
      %v1558 = vmul.f32 %v1551, %v827
      %v1559 = vmul.f32 %v1548, %v823
      %v1560 = vmul.f32 %v1552, %v827
      %v1561 = vld [vmem:[%s8] sm:$0xff]
      %v1562 = vld [vmem:[%s8 + $0x8] sm:$0xff]
      %v1563 = vld [vmem:[%s8 + $0x10] sm:$0xff]
      %v1564 = vld [vmem:[%s8 + $0x18] sm:$0xff]
      %v1565 = vld [vmem:[%s8 + $0x20] sm:$0xff]
      %v1566 = vld [vmem:[%s8 + $0x28] sm:$0xff]
      %v1567 = vld [vmem:[%s8 + $0x30] sm:$0xff]
      %v1568 = vld [vmem:[%s8 + $0x38] sm:$0xff]
      %v1569 = vld [vmem:[%s8 + $0x40] sm:$0xff]
      %v1570 = vld [vmem:[%s8 + $0x48] sm:$0xff]
      %v1571 = vld [vmem:[%s8 + $0x50] sm:$0xff]
      %v1572 = vld [vmem:[%s8 + $0x58] sm:$0xff]
      %v1573 = vld [vmem:[%s9] sm:$0xff]
      %v1574 = vld [vmem:[%s9 + $0x8] sm:$0xff]
      %v1575 = vld [vmem:[%s9 + $0x10] sm:$0xff]
      %v1576 = vld [vmem:[%s9 + $0x18] sm:$0xff]
      %v1578 = vsel %vm411, %v1573, 0
      %v1581 = vsel %vm411, %v1574, 0
      %v1584 = vsel %vm411, %v1575, 0
      %v1587 = vsel %vm411, %v1576, 0
      %1589 = vmatprep.subr.mxu0 %v381
      %1590 = vmatpush1.msra.mxu0 %v380
      %1591 = vmatprep.subr.mxu0 %v383
      %1592 = vmatpush1.msra.mxu0 %v382
      %1593 = vmatprep.subr.mxu0 0.0
      %1594 = vmatpush1.msra.mxu0 0.0
      %1595 = vmatprep.subr.mxu0 0.0
      %1596 = vmatpush1.msra.mxu0 0.0
      %1597 = vmatprep.subr.mxu0 0.0
      %1598 = vmatpush1.msra.mxu0 0.0
      %1599 = vmatprep.subr.mxu0 0.0
      %1600 = vmatpush1.msra.mxu0 0.0
      %1601 = vmatprep.subr.mxu0 0.0
      %1602 = vmatpush1.msra.mxu0 0.0
      %1603 = vmatprep.subr.mxu0 0.0
      %1604 = vmatpush1.msra.mxu0 0.0
      %1605 = vmatprep.subr.mxu0 0.0
      %1606 = vmatpush1.msra.mxu0 0.0
      %1607 = vmatprep.subr.mxu0 0.0
      %1608 = vmatpush1.msra.mxu0 0.0
      %1609 = vmatprep.subr.mxu0 0.0
      %1610 = vmatpush1.msra.mxu0 0.0
      %1611 = vmatprep.subr.mxu0 0.0
      %1612 = vmatpush1.msra.mxu0 0.0
      %1613 = vmatprep.subr.mxu0 0.0
      %1614 = vmatpush1.msra.mxu0 0.0
      %1615 = vmatprep.subr.mxu0 0.0
      %1616 = vmatpush1.msra.mxu0 0.0
      %1617 = vmatprep.subr.mxu0 0.0
      %1618 = vmatpush1.msra.mxu0 0.0
      %1619 = vmatprep.subr.mxu0 0.0
      %1620 = vmatpush1.msra.mxu0 0.0
      %1621 = vmatprep.subr.mxu0 0.0
      %1622 = vmatpush1.msra.mxu0 0.0
      %1623 = vmatprep.subr.mxu0 0.0
      %1624 = vmatpush1.msra.mxu0 0.0
      %1625 = vmatprep.subr.mxu0 0.0
      %1626 = vmatpush1.msra.mxu0 0.0
      %1627 = vmatprep.subr.mxu0 0.0
      %1628 = vmatpush1.msra.mxu0 0.0
      %1629 = vmatprep.subr.mxu0 0.0
      %1630 = vmatpush1.msra.mxu0 0.0
      %1631 = vmatprep.subr.mxu0 0.0
      %1632 = vmatpush1.msra.mxu0 0.0
      %1633 = vmatprep.subr.mxu0 0.0
      %1634 = vmatpush1.msra.mxu0 0.0
      %1635 = vmatprep.subr.mxu0 0.0
      %1636 = vmatpush1.msra.mxu0 0.0
      %1637 = vmatprep.subr.mxu0 0.0
      %1638 = vmatpush1.msra.mxu0 0.0
      %1639 = vmatprep.subr.mxu0 0.0
      %1640 = vmatpush1.msra.mxu0 0.0
      %1641 = vmatprep.subr.mxu0 0.0
      %1642 = vmatpush1.msra.mxu0 0.0
      %1643 = vmatprep.subr.mxu0 0.0
      %1644 = vmatpush1.msra.mxu0 0.0
      %1645 = vmatprep.subr.mxu0 0.0
      %1646 = vmatpush1.msra.mxu0 0.0
      %1647 = vmatprep.subr.mxu0 0.0
      %1648 = vmatpush1.msra.mxu0 0.0
      %1649 = vmatprep.subr.mxu0 0.0
      %1650 = vmatpush1.msra.mxu0 0.0
      %1651 = vmatprep.subr.mxu0 0.0
      %1652 = vmatpush1.msra.mxu0 0.0
      %1653 = vmatprep.mubr.f32.mxu0 0.0
      %1654 = vmatmul.mubr.f32.gmra.mrb[0].mxu0 %v1578
      %v1655 = vpop.f32.mrb[0].mxu0
      %v1656 = vadd.f32 0.0, %v1655
      %v1657 = vpop.f32.mrb[0].mxu0
      %v1658 = vadd.f32 0.0, %v1657
      %1659 = vmatprep.mubr.f32.mxu0 0.0
      %1660 = vmatmul.mubr.f32.gmra.mrb[0].mxu0 %v1581
      %v1661 = vpop.f32.mrb[0].mxu0
      %v1662 = vadd.f32 0.0, %v1661
      %v1663 = vpop.f32.mrb[0].mxu0
      %v1664 = vadd.f32 0.0, %v1663
      %1665 = vmatprep.mubr.f32.mxu0 0.0
      %1666 = vmatmul.mubr.f32.gmra.mrb[0].mxu0 %v1584
      %v1667 = vpop.f32.mrb[0].mxu0
      %v1668 = vadd.f32 0.0, %v1667
      %v1669 = vpop.f32.mrb[0].mxu0
      %v1670 = vadd.f32 0.0, %v1669
      %1671 = vmatprep.mubr.f32.mxu0 0.0
      %1672 = vmatmul.mubr.f32.gmra.mrb[0].mxu0 %v1587
      %v1673 = vpop.f32.mrb[0].mxu0
      %v1674 = vadd.f32 0.0, %v1673
      %v1675 = vpop.f32.mrb[0].mxu0
      %v1676 = vadd.f32 0.0, %v1675
      %1677 = vdwg.mxu0
      %v1679 = vsel %vm1007, %v1563, 0
      %v1682 = vsel %vm1007, %v1566, 0
      %v1685 = vsel %vm1007, %v1569, 0
      %v1688 = vsel %vm1007, %v1572, 0
      %1690 = vmatprep.subr.mxu0 %v1330
      %1691 = vmatpush1.msra.mxu0 %v1329
      %1692 = vmatprep.subr.mxu0 %v1332
      %1693 = vmatpush1.msra.mxu0 %v1331
      %1694 = vmatprep.subr.mxu0 %v1334
      %1695 = vmatpush1.msra.mxu0 %v1333
      %1696 = vmatprep.subr.mxu0 %v1336
      %1697 = vmatpush1.msra.mxu0 %v1335
      %1698 = vmatprep.subr.mxu0 %v1362
      %1699 = vmatpush1.msra.mxu0 %v1361
      %1700 = vmatprep.subr.mxu0 %v1364
      %1701 = vmatpush1.msra.mxu0 %v1363
      %1702 = vmatprep.subr.mxu0 %v1366
      %1703 = vmatpush1.msra.mxu0 %v1365
      %1704 = vmatprep.subr.mxu0 %v1368
      %1705 = vmatpush1.msra.mxu0 %v1367
      %1706 = vmatprep.subr.mxu0 %v1394
      %1707 = vmatpush1.msra.mxu0 %v1393
      %1708 = vmatprep.subr.mxu0 %v1396
      %1709 = vmatpush1.msra.mxu0 %v1395
      %1710 = vmatprep.subr.mxu0 %v1398
      %1711 = vmatpush1.msra.mxu0 %v1397
      %1712 = vmatprep.subr.mxu0 %v1400
      %1713 = vmatpush1.msra.mxu0 %v1399
      %1714 = vmatprep.subr.mxu0 %v1426
      %1715 = vmatpush1.msra.mxu0 %v1425
      %1716 = vmatprep.subr.mxu0 %v1428
      %1717 = vmatpush1.msra.mxu0 %v1427
      %1718 = vmatprep.subr.mxu0 %v1430
      %1719 = vmatpush1.msra.mxu0 %v1429
      %1720 = vmatprep.subr.mxu0 %v1432
      %1721 = vmatpush1.msra.mxu0 %v1431
      %1722 = vmatprep.subr.mxu0 %v1298
      %1723 = vmatpush1.msra.mxu0 %v1297
      %1724 = vmatprep.subr.mxu0 %v1300
      %1725 = vmatpush1.msra.mxu0 %v1299
      %1726 = vmatprep.subr.mxu0 %v1302
      %1727 = vmatpush1.msra.mxu0 %v1301
      %1728 = vmatprep.subr.mxu0 %v1304
      %1729 = vmatpush1.msra.mxu0 %v1303
      %1730 = vmatprep.subr.mxu0 %v1458
      %1731 = vmatpush1.msra.mxu0 %v1457
      %1732 = vmatprep.subr.mxu0 %v1460
      %1733 = vmatpush1.msra.mxu0 %v1459
      %1734 = vmatprep.subr.mxu0 %v1462
      %1735 = vmatpush1.msra.mxu0 %v1461
      %1736 = vmatprep.subr.mxu0 %v1464
      %1737 = vmatpush1.msra.mxu0 %v1463
      %1738 = vmatprep.subr.mxu0 %v1490
      %1739 = vmatpush1.msra.mxu0 %v1489
      %1740 = vmatprep.subr.mxu0 %v1492
      %1741 = vmatpush1.msra.mxu0 %v1491
      %1742 = vmatprep.subr.mxu0 %v1494
      %1743 = vmatpush1.msra.mxu0 %v1493
      %1744 = vmatprep.subr.mxu0 %v1496
      %1745 = vmatpush1.msra.mxu0 %v1495
      %1746 = vmatprep.subr.mxu0 %v1522
      %1747 = vmatpush1.msra.mxu0 %v1521
      %1748 = vmatprep.subr.mxu0 %v1524
      %1749 = vmatpush1.msra.mxu0 %v1523
      %1750 = vmatprep.subr.mxu0 %v1526
      %1751 = vmatpush1.msra.mxu0 %v1525
      %1752 = vmatprep.subr.mxu0 %v1528
      %1753 = vmatpush1.msra.mxu0 %v1527
      %1754 = vmatprep.mubr.f32.mxu0 %v1562
      %1755 = vmatmul.mubr.f32.gmra.mrb[0].mxu0 %v1561
      %v1756 = vpop.f32.mrb[0].mxu0
      %v1757 = vadd.f32 %v1656, %v1756
      %v1758 = vpop.f32.mrb[0].mxu0
      %v1759 = vadd.f32 %v1658, %v1758
      %1760 = vmatprep.mubr.f32.mxu0 %v1565
      %1761 = vmatmul.mubr.f32.gmra.mrb[0].mxu0 %v1564
      %v1762 = vpop.f32.mrb[0].mxu0
      %v1763 = vadd.f32 %v1662, %v1762
      %v1764 = vpop.f32.mrb[0].mxu0
      %v1765 = vadd.f32 %v1664, %v1764
      %1766 = vmatprep.mubr.f32.mxu0 %v1568
      %1767 = vmatmul.mubr.f32.gmra.mrb[0].mxu0 %v1567
      %v1768 = vpop.f32.mrb[0].mxu0
      %v1769 = vadd.f32 %v1668, %v1768
      %v1770 = vpop.f32.mrb[0].mxu0
      %v1771 = vadd.f32 %v1670, %v1770
      %1772 = vmatprep.mubr.f32.mxu0 %v1571
      %1773 = vmatmul.mubr.f32.gmra.mrb[0].mxu0 %v1570
      %v1774 = vpop.f32.mrb[0].mxu0
      %v1775 = vadd.f32 %v1674, %v1774
      %v1776 = vpop.f32.mrb[0].mxu0
      %v1777 = vadd.f32 %v1676, %v1776
      %1778 = vdwg.mxu0
      %1779 = vmatprep.subr.mxu0 %v1554
      %1780 = vmatpush1.msra.mxu0 %v1553
      %1781 = vmatprep.subr.mxu0 %v1556
      %1782 = vmatpush1.msra.mxu0 %v1555
      %1783 = vmatprep.subr.mxu0 %v1558
      %1784 = vmatpush1.msra.mxu0 %v1557
      %1785 = vmatprep.subr.mxu0 %v1560
      %1786 = vmatpush1.msra.mxu0 %v1559
      %1787 = vmatprep.subr.mxu0 0.0
      %1788 = vmatpush1.msra.mxu0 0.0
      %1789 = vmatprep.subr.mxu0 0.0
      %1790 = vmatpush1.msra.mxu0 0.0
      %1791 = vmatprep.subr.mxu0 0.0
      %1792 = vmatpush1.msra.mxu0 0.0
      %1793 = vmatprep.subr.mxu0 0.0
      %1794 = vmatpush1.msra.mxu0 0.0
      %1795 = vmatprep.subr.mxu0 0.0
      %1796 = vmatpush1.msra.mxu0 0.0
      %1797 = vmatprep.subr.mxu0 0.0
      %1798 = vmatpush1.msra.mxu0 0.0
      %1799 = vmatprep.subr.mxu0 0.0
      %1800 = vmatpush1.msra.mxu0 0.0
      %1801 = vmatprep.subr.mxu0 0.0
      %1802 = vmatpush1.msra.mxu0 0.0
      %1803 = vmatprep.subr.mxu0 0.0
      %1804 = vmatpush1.msra.mxu0 0.0
      %1805 = vmatprep.subr.mxu0 0.0
      %1806 = vmatpush1.msra.mxu0 0.0
      %1807 = vmatprep.subr.mxu0 0.0
      %1808 = vmatpush1.msra.mxu0 0.0
      %1809 = vmatprep.subr.mxu0 0.0
      %1810 = vmatpush1.msra.mxu0 0.0
      %1811 = vmatprep.subr.mxu0 0.0
      %1812 = vmatpush1.msra.mxu0 0.0
      %1813 = vmatprep.subr.mxu0 0.0
      %1814 = vmatpush1.msra.mxu0 0.0
      %1815 = vmatprep.subr.mxu0 0.0
      %1816 = vmatpush1.msra.mxu0 0.0
      %1817 = vmatprep.subr.mxu0 0.0
      %1818 = vmatpush1.msra.mxu0 0.0
      %1819 = vmatprep.subr.mxu0 0.0
      %1820 = vmatpush1.msra.mxu0 0.0
      %1821 = vmatprep.subr.mxu0 0.0
      %1822 = vmatpush1.msra.mxu0 0.0
      %1823 = vmatprep.subr.mxu0 0.0
      %1824 = vmatpush1.msra.mxu0 0.0
      %1825 = vmatprep.subr.mxu0 0.0
      %1826 = vmatpush1.msra.mxu0 0.0
      %1827 = vmatprep.subr.mxu0 0.0
      %1828 = vmatpush1.msra.mxu0 0.0
      %1829 = vmatprep.subr.mxu0 0.0
      %1830 = vmatpush1.msra.mxu0 0.0
      %1831 = vmatprep.subr.mxu0 0.0
      %1832 = vmatpush1.msra.mxu0 0.0
      %1833 = vmatprep.subr.mxu0 0.0
      %1834 = vmatpush1.msra.mxu0 0.0
      %1835 = vmatprep.subr.mxu0 0.0
      %1836 = vmatpush1.msra.mxu0 0.0
      %1837 = vmatprep.subr.mxu0 0.0
      %1838 = vmatpush1.msra.mxu0 0.0
      %1839 = vmatprep.subr.mxu0 0.0
      %1840 = vmatpush1.msra.mxu0 0.0
      %1841 = vmatprep.subr.mxu0 0.0
      %1842 = vmatpush1.msra.mxu0 0.0
      %1843 = vmatprep.mubr.f32.mxu0 0.0
      %1844 = vmatmul.mubr.f32.gmra.mrb[0].mxu0 %v1679
      %v1845 = vpop.f32.mrb[0].mxu0
      %v1846 = vadd.f32 %v1757, %v1845
      %v1847 = vpop.f32.mrb[0].mxu0
      %v1848 = vadd.f32 %v1759, %v1847
      %1849 = vmatprep.mubr.f32.mxu0 0.0
      %1850 = vmatmul.mubr.f32.gmra.mrb[0].mxu0 %v1682
      %v1851 = vpop.f32.mrb[0].mxu0
      %v1852 = vadd.f32 %v1763, %v1851
      %v1853 = vpop.f32.mrb[0].mxu0
      %v1854 = vadd.f32 %v1765, %v1853
      %1855 = vmatprep.mubr.f32.mxu0 0.0
      %1856 = vmatmul.mubr.f32.gmra.mrb[0].mxu0 %v1685
      %v1857 = vpop.f32.mrb[0].mxu0
      %v1858 = vadd.f32 %v1769, %v1857
      %v1859 = vpop.f32.mrb[0].mxu0
      %v1860 = vadd.f32 %v1771, %v1859
      %1861 = vmatprep.mubr.f32.mxu0 0.0
      %1862 = vmatmul.mubr.f32.gmra.mrb[0].mxu0 %v1688
      %v1863 = vpop.f32.mrb[0].mxu0
      %v1864 = vadd.f32 %v1775, %v1863
      %v1865 = vpop.f32.mrb[0].mxu0
      %v1866 = vadd.f32 %v1777, %v1865
      %1867 = vdwg.mxu0
      %1868 = vset.pattern.permute.xlu0 2
      %1869 = vperm.xlu0 %1868, %v386
      %v1870 = vpop.permute.xlu0 %1869
      %1872 = vset.pattern.permute.xlu0 2
      %1873 = vperm.xlu0 %1872, %v387
      %v1874 = vpop.permute.xlu0 %1873
      %1876 = vset.pattern.permute.xlu0 2
      %1877 = vperm.xlu0 %1876, %v388
      %v1878 = vpop.permute.xlu0 %1877
      %1880 = vset.pattern.permute.xlu0 2
      %1881 = vperm.xlu0 %1880, %v389
      %v1882 = vpop.permute.xlu0 %1881
      %v1884 = vadd.f32 %v1846, %v1870
      %v1885 = vadd.f32 %v1848, %v1870
      %v1886 = vadd.f32 %v1852, %v1874
      %v1887 = vadd.f32 %v1854, %v1874
      %v1888 = vadd.f32 %v1858, %v1878
      %v1889 = vadd.f32 %v1860, %v1878
      %v1890 = vadd.f32 %v1864, %v1882
      %v1891 = vadd.f32 %v1866, %v1882
      %1892 = vst [vmem:[%s379] sm:$0xff] %v1884
      %1893 = vst [vmem:[%s379 + $0x8] sm:$0xff] %v1885
      %1894 = vst [vmem:[%s379 + $0x10] sm:$0xff] %v1886
      %1895 = vst [vmem:[%s379 + $0x18] sm:$0xff] %v1887
      %1896 = vst [vmem:[%s379 + $0x20] sm:$0xff] %v1888
      %1897 = vst [vmem:[%s379 + $0x28] sm:$0xff] %v1889
      %1898 = vst [vmem:[%s379 + $0x30] sm:$0xff] %v1890
      %1899 = vst [vmem:[%s379 + $0x38] sm:$0xff] %v1891
      %p1900 = scmp.lt.s32.totalorder %s21, 1
      %s1901 = scalar_select %p1900, %s21, 1
      %s1902 = smul.addr %s1901, 8
      %s1903 = smul.addr %s1902, 8
      %s1904 = scalar_lea.vmem %s10, %s1903
      // Predicated region
      $region61: #{resnet_block_forward.1} parent=59 // pred_check
        %p1905 = pneg %p259
      $region62: #{resnet_block_forward.1} parent=59 // pred_check_branch
        %1907 = sbr.rel (%p1905) target = $region64
      $region63: #{resnet_block_forward.1} parent=59 // pred_region
        _
      $region64: #{resnet_block_forward.1} parent=59 // pred_fallthru
        _
    $region60: #{resnet_block_forward.1} parent=5 // pred_fallthru
      _
    %p1908 = scmp.le.s32.totalorder 2, %s16
    // Predicated region
    $region65: #{resnet_block_forward.1} parent=5 // pred_check
      %p1909 = pneg %p1908
    $region66: #{resnet_block_forward.1} parent=5 // pred_check_branch
      %1911 = sbr.rel (%p1909) target = $region68
    $region67: #{resnet_block_forward.1} parent=5 // pred_region
      %s1912 = ssub.s32 %s16, 2
      // Predicated region
      $region69: #{resnet_block_forward.1} parent=67 // pred_check
        %p1913 = pneg %p265
      $region70: #{resnet_block_forward.1} parent=67 // pred_check_branch
        %1915 = sbr.rel (%p1913) target = $region72
      $region71: #{resnet_block_forward.1} parent=67 // pred_region
        %p1916 = scmp.lt.s32.totalorder %s22, 1
        %s1917 = scalar_select %p1916, %s22, 1
        %s1918 = smul.addr %s1917, 8
        %s1919 = smul.addr %s1918, 8
        %s1920 = scalar_lea.vmem %s10, %s1919
      $region72: #{resnet_block_forward.1} parent=67 // pred_fallthru
        _
    $region68: #{resnet_block_forward.1} parent=5 // pred_fallthru
      _
  $region6: #{resnet_block_forward.1} parent=0 // loop_footer
    %s20 = sadd.s32 1, %s16
  $region7: #{resnet_block_forward.1} parent=0 // loop_footer_branch
    %15 = sbr.rel target = $region3
  $region8: #{resnet_block_forward.1} parent=0 // loop_exit
    _

</llo_original>
